<compile_context>
chip_gen: v5e
topology: v5e:2x2
jax: 0.10.0
libtpu: 0.0.40
codegen_flags: <defaults>
</compile_context>

<pallas_src>
import jax
import jax.numpy as jnp
from jax.experimental import pallas as pl
from jax.experimental.pallas import tpu as pltpu

IN_FEATURES = 784
HIDDEN = 500
HIDDEN_PAD = 512           # 500 -> 512: MXU-friendly K/N, clean bf16 sublane packing
N_CLASS = 10
N_CLASS_PAD = 128          # lane-dense padded class dim (one full vreg lane width)
PAD_BIAS = -1e30           # masks padded logits out of the softmax reduce (f32-exact)


def _mlp_kernel(x_ref, w1_ref, b1_ref, w2_ref, b2_ref, w3_ref, b3_ref, o_ref):
    # One batch tile per grid step; weights are VMEM-resident (constant index_map).
    x = x_ref[...]                                             # [TB, 784] bf16

    # Layer 1: Linear(784 -> 512 padded) + ReLU.  bf16 MXU inputs, f32 accumulate + VPU.
    h1 = jnp.dot(x, w1_ref[...], preferred_element_type=jnp.float32) + b1_ref[...]
    h1 = jnp.maximum(h1, 0.0)

    # Layer 2: Linear(512 -> 512 padded) + ReLU.
    h2 = jnp.dot(h1.astype(jnp.bfloat16), w2_ref[...],
                 preferred_element_type=jnp.float32) + b2_ref[...]
    h2 = jnp.maximum(h2, 0.0)

    # Layer 3: Linear(512 -> 128 padded).  Padded columns: zero weights + -1e30 bias.
    logits = jnp.dot(h2.astype(jnp.bfloat16), w3_ref[...],
                     preferred_element_type=jnp.float32) + b3_ref[...]

    # log_softmax over the (padded) class dim; exp of the -1e30 padding underflows to 0,
    # so the result over the first N_CLASS lanes is exact.
    m = jnp.max(logits, axis=-1, keepdims=True)
    shifted = logits - m
    lse = jnp.log(jnp.sum(jnp.exp(shifted), axis=-1, keepdims=True))
    o_ref[...] = (shifted - lse).astype(o_ref.dtype)


def _round_up(n, m):
    return (n + m - 1) // m * m


def baseline_ann_forward(x, params, *, max_tile=512):
    """x: [batch, 784] f32 -> log-probs [batch, 10] f32."""
    w1, b1, w2, b2, w3, b3 = params
    # b3 must stay f32: the -1e30 padding trick relies on exact f32 exp underflow.
    assert b3.dtype == jnp.float32, "padded classifier bias must remain float32"
    B = x.shape[0]

    # Cast activations once in the wrapper: halves x HBM traffic, MXU consumes bf16 anyway.
    x = x.astype(jnp.bfloat16)

    # Batch tile: 16-row aligned (bf16 sublane packing); aim for >= 2 grid steps so both
    # v7x TensorCores get work for realistic batch sizes.
    TB = max(16, min(max_tile, _round_up(pl.cdiv(B, 2), 16)))
    Bp = _round_up(B, TB)
    if Bp != B:
        x = jnp.pad(x, ((0, Bp - B), (0, 0)))

    grid = (Bp // TB,)
    resident = lambda shape: pl.BlockSpec(shape, lambda i: (0, 0))  # weights stay in VMEM

    flops = 2 * Bp * (IN_FEATURES * HIDDEN_PAD + HIDDEN_PAD * HIDDEN_PAD
                      + HIDDEN_PAD * N_CLASS_PAD)
    bytes_accessed = (
        w1.size * w1.dtype.itemsize + w2.size * w2.dtype.itemsize
        + w3.size * w3.dtype.itemsize
        + (b1.size + b2.size + b3.size) * 4
        + Bp * IN_FEATURES * 2 + Bp * N_CLASS_PAD * 4)
    cost = pl.CostEstimate(flops=flops,
                           transcendentals=Bp * (N_CLASS_PAD + 1),
                           bytes_accessed=bytes_accessed)

    out = pl.pallas_call(
        _mlp_kernel,
        out_shape=jax.ShapeDtypeStruct((Bp, N_CLASS_PAD), jnp.float32),
        grid=grid,
        in_specs=[
            pl.BlockSpec((TB, IN_FEATURES), lambda i: (i, 0)),
            resident(w1.shape), resident(b1.shape),
            resident(w2.shape), resident(b2.shape),
            resident(w3.shape), resident(b3.shape),
        ],
        out_specs=pl.BlockSpec((TB, N_CLASS_PAD), lambda i: (i, 0)),
        compiler_params=pltpu.CompilerParams(
            dimension_semantics=("parallel",),
            vmem_limit_bytes=32 * 1024 * 1024),
        cost_estimate=cost,
    )(x, w1, b1, w2, b2, w3, b3)

    return out[:B, :N_CLASS]


def init_params(key):
    """PyTorch nn.Linear default init (U[-1/sqrt(fan_in), +1/sqrt(fan_in)]).
    Weights stored bf16 in [in, out] layout; hidden padded 500->512, classes 10->128."""
    def linear(k, fan_in, fan_out):
        kw, kb = jax.random.split(k)
        bound = 1.0 / jnp.sqrt(jnp.float32(fan_in))
        w = jax.random.uniform(kw, (fan_in, fan_out), jnp.float32, -bound, bound)
        b = jax.random.uniform(kb, (1, fan_out), jnp.float32, -bound, bound)
        return w, b

    k1, k2, k3 = jax.random.split(key, 3)
    w1, b1 = linear(k1, IN_FEATURES, HIDDEN)
    w2, b2 = linear(k2, HIDDEN, HIDDEN)
    w3, b3 = linear(k3, HIDDEN, N_CLASS)

    # Zero-pad hidden dim to 512 (exact: padded h columns are relu(0)=0 and multiply zero
    # weight rows downstream).  Classifier padded to 128 lanes with -1e30 bias.
    w1p = jnp.zeros((IN_FEATURES, HIDDEN_PAD), jnp.float32).at[:, :HIDDEN].set(w1)
    b1p = jnp.zeros((1, HIDDEN_PAD), jnp.float32).at[:, :HIDDEN].set(b1)
    w2p = jnp.zeros((HIDDEN_PAD, HIDDEN_PAD), jnp.float32).at[:HIDDEN, :HIDDEN].set(w2)
    b2p = jnp.zeros((1, HIDDEN_PAD), jnp.float32).at[:, :HIDDEN].set(b2)
    w3p = jnp.zeros((HIDDEN_PAD, N_CLASS_PAD), jnp.float32).at[:HIDDEN, :N_CLASS].set(w3)
    b3p = jnp.full((1, N_CLASS_PAD), PAD_BIAS, jnp.float32).at[:, :N_CLASS].set(b3)

    # bf16 storage for weights only (halves HBM traffic); biases stay f32.
    return (w1p.astype(jnp.bfloat16), b1p,
            w2p.astype(jnp.bfloat16), b2p,
            w3p.astype(jnp.bfloat16), b3p)


def _ref_forward(x, params):
    """Pure-JAX reference with the same bf16-operand / f32-accumulate precision path."""
    w1, b1, w2, b2, w3, b3 = params
    f32 = jnp.float32
    xb = x.astype(jnp.bfloat16)
    h1 = jnp.maximum(jnp.dot(xb, w1, preferred_element_type=f32) + b1, 0.0)
    h2 = jnp.maximum(
        jnp.dot(h1.astype(jnp.bfloat16), w2, preferred_element_type=f32) + b2, 0.0)
    logits = jnp.dot(h2.astype(jnp.bfloat16), w3, preferred_element_type=f32) + b3
    return jax.nn.log_softmax(logits[:, :N_CLASS], axis=1)


if __name__ == "__main__":
    key = jax.random.PRNGKey(0)
    k_in, k_par = jax.random.split(key)

    batch = 8
    x = jax.random.normal(k_in, (batch, IN_FEATURES), dtype=jnp.float32)
    params = init_params(k_par)

    out = baseline_ann_forward(x, params)
    out = jax.block_until_ready(out)

    ref = _ref_forward(x, params)
    assert out.shape == (batch, N_CLASS)
    assert bool(jnp.allclose(out, ref, atol=2e-3, rtol=2e-3)), float(
        jnp.max(jnp.abs(out - ref)))

    print("KERNEL_OK")
</pallas_src>

<mosaic_0001>
module attributes {stable_mosaic.version = 11 : i64} {
  func.func @_mlp_kernel(%arg0: i32, %arg1: memref<16x784xbf16, #tpu.memory_space<vmem>>, %arg2: memref<784x512xbf16, #tpu.memory_space<vmem>>, %arg3: memref<1x512xf32, #tpu.memory_space<vmem>>, %arg4: memref<512x512xbf16, #tpu.memory_space<vmem>>, %arg5: memref<1x512xf32, #tpu.memory_space<vmem>>, %arg6: memref<512x128xbf16, #tpu.memory_space<vmem>>, %arg7: memref<1x128xf32, #tpu.memory_space<vmem>>, %arg8: memref<16x128xf32, #tpu.memory_space<vmem>>) attributes {dimension_semantics = [#tpu.dimension_semantics<parallel>], iteration_bounds = array<i64: 1>, scalar_prefetch = 0 : i64, scratch_operands = 0 : i64, tpu.core_type = #tpu.core_type<tc>, window_params = [{transform_indices = @transform_0, window_bounds = array<i64: 16, 784>}, {pipeline_mode = #tpu.pipeline_mode<synchronous>, transform_indices = @transform_1, window_bounds = array<i64: 784, 512>}, {pipeline_mode = #tpu.pipeline_mode<synchronous>, transform_indices = @transform_2, window_bounds = array<i64: 1, 512>}, {pipeline_mode = #tpu.pipeline_mode<synchronous>, transform_indices = @transform_3, window_bounds = array<i64: 512, 512>}, {pipeline_mode = #tpu.pipeline_mode<synchronous>, transform_indices = @transform_4, window_bounds = array<i64: 1, 512>}, {pipeline_mode = #tpu.pipeline_mode<synchronous>, transform_indices = @transform_5, window_bounds = array<i64: 512, 128>}, {pipeline_mode = #tpu.pipeline_mode<synchronous>, transform_indices = @transform_6, window_bounds = array<i64: 1, 128>}, {transform_indices = @transform_7, window_bounds = array<i64: 16, 128>}]} {
    %c0 = arith.constant 0 : index
    %c0_0 = arith.constant 0 : index
    %0 = vector.load %arg1[%c0, %c0_0] : memref<16x784xbf16, #tpu.memory_space<vmem>>, vector<16x784xbf16>
    %c0_1 = arith.constant 0 : index
    %c0_2 = arith.constant 0 : index
    %1 = vector.load %arg2[%c0_1, %c0_2] : memref<784x512xbf16, #tpu.memory_space<vmem>>, vector<784x512xbf16>
    %cst = arith.constant dense<0.000000e+00> : vector<16x512xf32>
    %2 = tpu.matmul %0, %1, %cst {dimension_numbers = #tpu.dot_dimension_numbers<[1], [0], [0], [1], [0, 0, 1, 1], [], []>} : vector<16x784xbf16>, vector<784x512xbf16>, vector<16x512xf32> -> vector<16x512xf32>
    %c0_3 = arith.constant 0 : index
    %c0_4 = arith.constant 0 : index
    %3 = vector.load %arg3[%c0_3, %c0_4] : memref<1x512xf32, #tpu.memory_space<vmem>>, vector<1x512xf32>
    %4 = vector.broadcast %3 : vector<1x512xf32> to vector<16x512xf32>
    %5 = arith.addf %2, %4 : vector<16x512xf32>
    %cst_5 = arith.constant 0.000000e+00 : f32
    %6 = vector.broadcast %cst_5 : f32 to vector<16x512xf32>
    %7 = arith.maximumf %5, %6 : vector<16x512xf32>
    %8 = arith.truncf %7 : vector<16x512xf32> to vector<16x512xbf16>
    %c0_6 = arith.constant 0 : index
    %c0_7 = arith.constant 0 : index
    %9 = vector.load %arg4[%c0_6, %c0_7] : memref<512x512xbf16, #tpu.memory_space<vmem>>, vector<512x512xbf16>
    %cst_8 = arith.constant dense<0.000000e+00> : vector<16x512xf32>
    %10 = tpu.matmul %8, %9, %cst_8 {dimension_numbers = #tpu.dot_dimension_numbers<[1], [0], [0], [1], [0, 0, 1, 1], [], []>} : vector<16x512xbf16>, vector<512x512xbf16>, vector<16x512xf32> -> vector<16x512xf32>
    %c0_9 = arith.constant 0 : index
    %c0_10 = arith.constant 0 : index
    %11 = vector.load %arg5[%c0_9, %c0_10] : memref<1x512xf32, #tpu.memory_space<vmem>>, vector<1x512xf32>
    %12 = vector.broadcast %11 : vector<1x512xf32> to vector<16x512xf32>
    %13 = arith.addf %10, %12 : vector<16x512xf32>
    %cst_11 = arith.constant 0.000000e+00 : f32
    %14 = vector.broadcast %cst_11 : f32 to vector<16x512xf32>
    %15 = arith.maximumf %13, %14 : vector<16x512xf32>
    %16 = arith.truncf %15 : vector<16x512xf32> to vector<16x512xbf16>
    %c0_12 = arith.constant 0 : index
    %c0_13 = arith.constant 0 : index
    %17 = vector.load %arg6[%c0_12, %c0_13] : memref<512x128xbf16, #tpu.memory_space<vmem>>, vector<512x128xbf16>
    %cst_14 = arith.constant dense<0.000000e+00> : vector<16x128xf32>
    %18 = tpu.matmul %16, %17, %cst_14 {dimension_numbers = #tpu.dot_dimension_numbers<[1], [0], [0], [1], [0, 0, 1, 1], [], []>} : vector<16x512xbf16>, vector<512x128xbf16>, vector<16x128xf32> -> vector<16x128xf32>
    %c0_15 = arith.constant 0 : index
    %c0_16 = arith.constant 0 : index
    %19 = vector.load %arg7[%c0_15, %c0_16] : memref<1x128xf32, #tpu.memory_space<vmem>>, vector<1x128xf32>
    %20 = vector.broadcast %19 : vector<1x128xf32> to vector<16x128xf32>
    %21 = arith.addf %18, %20 : vector<16x128xf32>
    %cst_17 = arith.constant dense<0xFF800000> : vector<16xf32>
    %22 = vector.multi_reduction <maximumf>, %21, %cst_17 [1] : vector<16x128xf32> to vector<16xf32>
    %23 = vector.shape_cast %22 : vector<16xf32> to vector<16x1xf32>
    %24 = vector.broadcast %23 : vector<16x1xf32> to vector<16x128xf32>
    %25 = arith.subf %21, %24 : vector<16x128xf32>
    %26 = math.exp %25 : vector<16x128xf32>
    %cst_18 = arith.constant dense<0.000000e+00> : vector<16xf32>
    %27 = vector.multi_reduction <add>, %26, %cst_18 [1] : vector<16x128xf32> to vector<16xf32>
    %28 = vector.shape_cast %27 : vector<16xf32> to vector<16x1xf32>
    %29 = math.log %28 : vector<16x1xf32>
    %30 = vector.broadcast %29 : vector<16x1xf32> to vector<16x128xf32>
    %31 = arith.subf %25, %30 : vector<16x128xf32>
    %c0_19 = arith.constant 0 : index
    %c0_20 = arith.constant 0 : index
    %32 = vector.load %arg8[%c0_19, %c0_20] : memref<16x128xf32, #tpu.memory_space<vmem>>, vector<16x128xf32>
    tpu.vector_store %arg8[%c0_19, %c0_20], %31 {strides = array<i32>} : memref<16x128xf32, #tpu.memory_space<vmem>>, vector<16x128xf32>,
    return
  }
  func.func @transform_0(%arg0: i32) -> (i32, i32) {
    %c0_i32 = arith.constant 0 : i32
    %c0_i32_0 = arith.constant 0 : i32
    return %arg0, %c0_i32 : i32, i32
  }
  func.func @transform_1(%arg0: i32) -> (i32, i32) {
    %c0_i32 = arith.constant 0 : i32
    %c0_i32_0 = arith.constant 0 : i32
    %c0_i32_1 = arith.constant 0 : i32
    return %c0_i32, %c0_i32_0 : i32, i32
  }
  func.func @transform_2(%arg0: i32) -> (i32, i32) {
    %c0_i32 = arith.constant 0 : i32
    %c0_i32_0 = arith.constant 0 : i32
    %c0_i32_1 = arith.constant 0 : i32
    return %c0_i32, %c0_i32_0 : i32, i32
  }
  func.func @transform_3(%arg0: i32) -> (i32, i32) {
    %c0_i32 = arith.constant 0 : i32
    %c0_i32_0 = arith.constant 0 : i32
    %c0_i32_1 = arith.constant 0 : i32
    return %c0_i32, %c0_i32_0 : i32, i32
  }
  func.func @transform_4(%arg0: i32) -> (i32, i32) {
    %c0_i32 = arith.constant 0 : i32
    %c0_i32_0 = arith.constant 0 : i32
    %c0_i32_1 = arith.constant 0 : i32
    return %c0_i32, %c0_i32_0 : i32, i32
  }
  func.func @transform_5(%arg0: i32) -> (i32, i32) {
    %c0_i32 = arith.constant 0 : i32
    %c0_i32_0 = arith.constant 0 : i32
    %c0_i32_1 = arith.constant 0 : i32
    return %c0_i32, %c0_i32_0 : i32, i32
  }
  func.func @transform_6(%arg0: i32) -> (i32, i32) {
    %c0_i32 = arith.constant 0 : i32
    %c0_i32_0 = arith.constant 0 : i32
    %c0_i32_1 = arith.constant 0 : i32
    return %c0_i32, %c0_i32_0 : i32, i32
  }
  func.func @transform_7(%arg0: i32) -> (i32, i32) {
    %c0_i32 = arith.constant 0 : i32
    %c0_i32_0 = arith.constant 0 : i32
    return %arg0, %c0_i32 : i32, i32
  }
}

</mosaic_0001>

<llo_original>
// kernel: tpu_custom_call.1
$region0: #{tpu_custom_call.1}
  #allocation0 [shape = 'u32[]', space=smem, size = 0x4, offset = 0x4, fixed_abs, tag = 'smem constant byte address 0x4 - core index']
  #allocation1 [shape = 'u32[72,128]{1,0:T(1,128)}', space=vmem, size = 0x9000, scoped, tag = 'internal scratch']
  %s0 = inlined_call_operand.hbm [shape: bf16[16,784], index: 0, kind: input, shape index: {}]
  %s1 = inlined_call_operand.hbm [shape: bf16[784,512], index: 1, kind: input, shape index: {}]
  %s2 = inlined_call_operand.hbm [shape: f32[1,512], index: 2, kind: input, shape index: {}]
  %s3 = inlined_call_operand.hbm [shape: bf16[512,512], index: 3, kind: input, shape index: {}]
  %s4 = inlined_call_operand.hbm [shape: f32[1,512], index: 4, kind: input, shape index: {}]
  %s5 = inlined_call_operand.hbm [shape: bf16[512,128], index: 5, kind: input, shape index: {}]
  %s6 = inlined_call_operand.vmem [shape: f32[1,128], index: 6, kind: input, shape index: {}]
  %s7 = inlined_call_operand.hbm [shape: f32[16,128], index: 7, kind: output, shape index: {}]
  %s8 = sld [smem:[#allocation0]]
  $region62: #{tpu_custom_call.1} parent=0
    _
  %s10 = ssub.s32 1, %s8
  %s11 = scalar_select 0, %s10, %s8
  $region1: #{tpu_custom_call.1} parent=0
    #allocation2 [shape = 'u8[28672]{0}', space=vmem, size = 0x7000, scoped, tag = 'input window, operand 0, single buffered']
    #allocation3 [shape = 's32[1]{0}', space=sflag, size = 0x4, scoped, tag = 'scoped memory for tpu_custom_call.1']
    #allocation4 [shape = 's32[1]{0}', space=sflag, size = 0x4, scoped, tag = 'scoped memory for tpu_custom_call.1']
    #allocation5 [shape = 'u8[802816]{0}', space=vmem, size = 0xc4000, scoped, tag = 'input window, operand 1, single buffered']
    #allocation6 [shape = 's32[1]{0}', space=sflag, size = 0x4, scoped, tag = 'scoped memory for tpu_custom_call.1']
    #allocation7 [shape = 'u8[2048]{0}', space=vmem, size = 0x800, scoped, tag = 'input window, operand 2, single buffered']
    #allocation8 [shape = 'u8[524288]{0}', space=vmem, size = 0x80000, scoped, tag = 'input window, operand 3, single buffered']
    #allocation9 [shape = 's32[1]{0}', space=sflag, size = 0x4, scoped, tag = 'scoped memory for tpu_custom_call.1']
    #allocation10 [shape = 'u8[2048]{0}', space=vmem, size = 0x800, scoped, tag = 'input window, operand 4, single buffered']
    #allocation11 [shape = 'u8[131072]{0}', space=vmem, size = 0x20000, scoped, tag = 'input window, operand 5, single buffered']
    #allocation12 [shape = 's32[1]{0}', space=sflag, size = 0x4, scoped, tag = 'scoped memory for tpu_custom_call.1']
    #allocation13 [shape = 'u8[8192]{0}', space=vmem, size = 0x2000, scoped, tag = 'output window, operand 0, single buffered']
    %12 = vsyncpa [#allocation3], 0
    %13 = vsyncpa [#allocation6], 0
    %14 = vsyncpa [#allocation9], 0
    %15 = vsyncpa [#allocation12], 0
    %16 = vsyncpa [#allocation4], 0
    // Predicated region
    $region2: #{tpu_custom_call.1} parent=1 // pred_check
      _
    $region3: #{tpu_custom_call.1} parent=1 // pred_check_branch
      %18 = sbr.rel (0) target = $region5
    $region4: #{tpu_custom_call.1} parent=1 // pred_region
      %20 = vsyncadd [#allocation3], 0
      %s21 = sshll.u32 %s0, 4
      %s22 = int_to_ptr.hbm [resolvable:$true] %s21
      %s23 = sshll.u32 [#allocation2], 4
      %s24 = int_to_ptr.vmem [resolvable:$true] %s23
      %29 = dma.hbm_to_vmem [thread:$0]  %s22, 896, %s24, [#allocation3], 448, 448, 28
    $region5: #{tpu_custom_call.1} parent=1 // pred_fallthru
      _
    // Predicated region
    $region6: #{tpu_custom_call.1} parent=1 // pred_check
      _
    $region7: #{tpu_custom_call.1} parent=1 // pred_check_branch
      %31 = sbr.rel (0) target = $region9
    $region8: #{tpu_custom_call.1} parent=1 // pred_region
      %33 = vsyncadd [#allocation6], 0
      %s34 = sshll.u32 %s1, 4
      %s35 = int_to_ptr.hbm [resolvable:$true] %s34
      %s36 = sshll.u32 [#allocation5], 4
      %s37 = int_to_ptr.vmem [resolvable:$true] %s36
      %42 = dma.hbm_to_vmem [thread:$0]  %s35, 25088, %s37, [#allocation6], 256, 256, 16
    $region9: #{tpu_custom_call.1} parent=1 // pred_fallthru
      _
    // Predicated region
    $region10: #{tpu_custom_call.1} parent=1 // pred_check
      _
    $region11: #{tpu_custom_call.1} parent=1 // pred_check_branch
      %44 = sbr.rel (0) target = $region13
    $region12: #{tpu_custom_call.1} parent=1 // pred_region
      %46 = vsyncadd [#allocation6], 0
      %s48 = sshll.u32 %s2, 4
      %s49 = int_to_ptr.hbm [resolvable:$true] %s48
      %s50 = sshll.u32 [#allocation7], 4
      %s51 = int_to_ptr.vmem [resolvable:$true] %s50
      %53 = dma.hbm_to_vmem [thread:$0]  %s49, 64, %s51, [#allocation6]
    $region13: #{tpu_custom_call.1} parent=1 // pred_fallthru
      _
    // Predicated region
    $region14: #{tpu_custom_call.1} parent=1 // pred_check
      _
    $region15: #{tpu_custom_call.1} parent=1 // pred_check_branch
      %55 = sbr.rel (0) target = $region17
    $region16: #{tpu_custom_call.1} parent=1 // pred_region
      %57 = vsyncadd [#allocation9], 0
      %s58 = sshll.u32 %s3, 4
      %s59 = int_to_ptr.hbm [resolvable:$true] %s58
      %s60 = sshll.u32 [#allocation8], 4
      %s61 = int_to_ptr.vmem [resolvable:$true] %s60
      %66 = dma.hbm_to_vmem [thread:$0]  %s59, 16384, %s61, [#allocation9], 256, 256, 16
    $region17: #{tpu_custom_call.1} parent=1 // pred_fallthru
      _
    // Predicated region
    $region18: #{tpu_custom_call.1} parent=1 // pred_check
      _
    $region19: #{tpu_custom_call.1} parent=1 // pred_check_branch
      %68 = sbr.rel (0) target = $region21
    $region20: #{tpu_custom_call.1} parent=1 // pred_region
      %70 = vsyncadd [#allocation9], 0
      %s72 = sshll.u32 %s4, 4
      %s73 = int_to_ptr.hbm [resolvable:$true] %s72
      %s74 = sshll.u32 [#allocation10], 4
      %s75 = int_to_ptr.vmem [resolvable:$true] %s74
      %77 = dma.hbm_to_vmem [thread:$0]  %s73, 64, %s75, [#allocation9]
    $region21: #{tpu_custom_call.1} parent=1 // pred_fallthru
      _
    // Predicated region
    $region22: #{tpu_custom_call.1} parent=1 // pred_check
      _
    $region23: #{tpu_custom_call.1} parent=1 // pred_check_branch
      %79 = sbr.rel (0) target = $region25
    $region24: #{tpu_custom_call.1} parent=1 // pred_region
      %81 = vsyncadd [#allocation12], 0
      %s82 = sshll.u32 %s5, 4
      %s83 = int_to_ptr.hbm [resolvable:$true] %s82
      %s84 = sshll.u32 [#allocation11], 4
      %s85 = int_to_ptr.vmem [resolvable:$true] %s84
      %90 = dma.hbm_to_vmem [thread:$0]  %s83, 4096, %s85, [#allocation12], 64, 64, 4
    $region25: #{tpu_custom_call.1} parent=1 // pred_fallthru
      _
    // Predicated region
    $region26: #{tpu_custom_call.1} parent=1 // pred_check
      _
    $region27: #{tpu_custom_call.1} parent=1 // pred_check_branch
      %92 = sbr.rel (0) target = $region29
    $region28: #{tpu_custom_call.1} parent=1 // pred_region
      _
    $region29: #{tpu_custom_call.1} parent=1 // pred_fallthru
      _
    // Predicated region
    $region30: #{tpu_custom_call.1} parent=1 // pred_check
      _
    $region31: #{tpu_custom_call.1} parent=1 // pred_check_branch
      %94 = sbr.rel (0) target = $region33
    $region32: #{tpu_custom_call.1} parent=1 // pred_region
      %96 = dma.done [#allocation3], 896
    $region33: #{tpu_custom_call.1} parent=1 // pred_fallthru
      _
    // Predicated region
    $region34: #{tpu_custom_call.1} parent=1 // pred_check
      _
    $region35: #{tpu_custom_call.1} parent=1 // pred_check_branch
      %98 = sbr.rel (0) target = $region37
    $region36: #{tpu_custom_call.1} parent=1 // pred_region
      %100 = dma.done [#allocation6], 25088
    $region37: #{tpu_custom_call.1} parent=1 // pred_fallthru
      _
    // Predicated region
    $region38: #{tpu_custom_call.1} parent=1 // pred_check
      _
    $region39: #{tpu_custom_call.1} parent=1 // pred_check_branch
      %102 = sbr.rel (0) target = $region41
    $region40: #{tpu_custom_call.1} parent=1 // pred_region
      %104 = dma.done [#allocation6], 64
    $region41: #{tpu_custom_call.1} parent=1 // pred_fallthru
      _
    // Predicated region
    $region42: #{tpu_custom_call.1} parent=1 // pred_check
      _
    $region43: #{tpu_custom_call.1} parent=1 // pred_check_branch
      %106 = sbr.rel (0) target = $region45
    $region44: #{tpu_custom_call.1} parent=1 // pred_region
      %108 = dma.done [#allocation9], 16384
    $region45: #{tpu_custom_call.1} parent=1 // pred_fallthru
      _
    // Predicated region
    $region46: #{tpu_custom_call.1} parent=1 // pred_check
      _
    $region47: #{tpu_custom_call.1} parent=1 // pred_check_branch
      %110 = sbr.rel (0) target = $region49
    $region48: #{tpu_custom_call.1} parent=1 // pred_region
      %112 = dma.done [#allocation9], 64
    $region49: #{tpu_custom_call.1} parent=1 // pred_fallthru
      _
    // Predicated region
    $region50: #{tpu_custom_call.1} parent=1 // pred_check
      _
    $region51: #{tpu_custom_call.1} parent=1 // pred_check_branch
      %114 = sbr.rel (0) target = $region53
    $region52: #{tpu_custom_call.1} parent=1 // pred_region
      %116 = dma.done [#allocation12], 4096
    $region53: #{tpu_custom_call.1} parent=1 // pred_fallthru
      _
    %v118 = vld [vmem:[#allocation2] sm:$0xff]
    %v119 = vld [vmem:[#allocation2 + $0x8] sm:$0xff]
    %v120 = vld [vmem:[#allocation2 + $0x10] sm:$0xff]
    %v121 = vld [vmem:[#allocation2 + $0x18] sm:$0xf]
    %v122 = vld [vmem:[#allocation2 + $0x1c] sm:$0xff]
    %v123 = vld [vmem:[#allocation2 + $0x24] sm:$0xff]
    %v124 = vld [vmem:[#allocation2 + $0x2c] sm:$0xff]
    %v125 = vld [vmem:[#allocation2 + $0x34] sm:$0xf]
    %v126 = vld [vmem:[#allocation5] sm:$0xff]
    %v127 = vld [vmem:[#allocation5 + $0x8] sm:$0xff]
    %v128 = vld [vmem:[#allocation5 + $0x10] sm:$0xff]
    %v129 = vld [vmem:[#allocation5 + $0x18] sm:$0xff]
    %v130 = vld [vmem:[#allocation5 + $0x20] sm:$0xff]
    %v131 = vld [vmem:[#allocation5 + $0x28] sm:$0xff]
    %v132 = vld [vmem:[#allocation5 + $0x30] sm:$0xff]
    %v133 = vld [vmem:[#allocation5 + $0x38] sm:$0xff]
    %v134 = vld [vmem:[#allocation5 + $0x40] sm:$0xff]
    %v135 = vld [vmem:[#allocation5 + $0x48] sm:$0xff]
    %v136 = vld [vmem:[#allocation5 + $0x50] sm:$0xff]
    %v137 = vld [vmem:[#allocation5 + $0x58] sm:$0xff]
    %v138 = vld [vmem:[#allocation5 + $0x60] sm:$0xff]
    %v139 = vld [vmem:[#allocation5 + $0x68] sm:$0xff]
    %v140 = vld [vmem:[#allocation5 + $0x70] sm:$0xff]
    %v141 = vld [vmem:[#allocation5 + $0x78] sm:$0xff]
    %v142 = vld [vmem:[#allocation5 + $0x80] sm:$0xff]
    %v143 = vld [vmem:[#allocation5 + $0x88] sm:$0xff]
    %v144 = vld [vmem:[#allocation5 + $0x90] sm:$0xff]
    %v145 = vld [vmem:[#allocation5 + $0x98] sm:$0xff]
    %v146 = vld [vmem:[#allocation5 + $0xa0] sm:$0xff]
    %v147 = vld [vmem:[#allocation5 + $0xa8] sm:$0xff]
    %v148 = vld [vmem:[#allocation5 + $0xb0] sm:$0xff]
    %v149 = vld [vmem:[#allocation5 + $0xb8] sm:$0xff]
    %v150 = vld [vmem:[#allocation5 + $0xc0] sm:$0xff]
    %v151 = vld [vmem:[#allocation5 + $0xc8] sm:$0xff]
    %v152 = vld [vmem:[#allocation5 + $0xd0] sm:$0xff]
    %v153 = vld [vmem:[#allocation5 + $0xd8] sm:$0xff]
    %v154 = vld [vmem:[#allocation5 + $0xe0] sm:$0xff]
    %v155 = vld [vmem:[#allocation5 + $0xe8] sm:$0xff]
    %v156 = vld [vmem:[#allocation5 + $0xf0] sm:$0xff]
    %v157 = vld [vmem:[#allocation5 + $0xf8] sm:$0xff]
    %v158 = vld [vmem:[#allocation5 + $0x100] sm:$0xff]
    %v159 = vld [vmem:[#allocation5 + $0x108] sm:$0xff]
    %v160 = vld [vmem:[#allocation5 + $0x110] sm:$0xff]
    %v161 = vld [vmem:[#allocation5 + $0x118] sm:$0xff]
    %v162 = vld [vmem:[#allocation5 + $0x120] sm:$0xff]
    %v163 = vld [vmem:[#allocation5 + $0x128] sm:$0xff]
    %v164 = vld [vmem:[#allocation5 + $0x130] sm:$0xff]
    %v165 = vld [vmem:[#allocation5 + $0x138] sm:$0xff]
    %v166 = vld [vmem:[#allocation5 + $0x140] sm:$0xff]
    %v167 = vld [vmem:[#allocation5 + $0x148] sm:$0xff]
    %v168 = vld [vmem:[#allocation5 + $0x150] sm:$0xff]
    %v169 = vld [vmem:[#allocation5 + $0x158] sm:$0xff]
    %v170 = vld [vmem:[#allocation5 + $0x160] sm:$0xff]
    %v171 = vld [vmem:[#allocation5 + $0x168] sm:$0xff]
    %v172 = vld [vmem:[#allocation5 + $0x170] sm:$0xff]
    %v173 = vld [vmem:[#allocation5 + $0x178] sm:$0xff]
    %v174 = vld [vmem:[#allocation5 + $0x180] sm:$0xff]
    %v175 = vld [vmem:[#allocation5 + $0x188] sm:$0xff]
    %v176 = vld [vmem:[#allocation5 + $0x190] sm:$0xff]
    %v177 = vld [vmem:[#allocation5 + $0x198] sm:$0xff]
    %v178 = vld [vmem:[#allocation5 + $0x1a0] sm:$0xff]
    %v179 = vld [vmem:[#allocation5 + $0x1a8] sm:$0xff]
    %v180 = vld [vmem:[#allocation5 + $0x1b0] sm:$0xff]
    %v181 = vld [vmem:[#allocation5 + $0x1b8] sm:$0xff]
    %v182 = vld [vmem:[#allocation5 + $0x1c0] sm:$0xff]
    %v183 = vld [vmem:[#allocation5 + $0x1c8] sm:$0xff]
    %v184 = vld [vmem:[#allocation5 + $0x1d0] sm:$0xff]
    %v185 = vld [vmem:[#allocation5 + $0x1d8] sm:$0xff]
    %v186 = vld [vmem:[#allocation5 + $0x1e0] sm:$0xff]
    %v187 = vld [vmem:[#allocation5 + $0x1e8] sm:$0xff]
    %v188 = vld [vmem:[#allocation5 + $0x1f0] sm:$0xff]
    %v189 = vld [vmem:[#allocation5 + $0x1f8] sm:$0xff]
    %v190 = vld [vmem:[#allocation5 + $0x200] sm:$0xff]
    %v191 = vld [vmem:[#allocation5 + $0x208] sm:$0xff]
    %v192 = vld [vmem:[#allocation5 + $0x210] sm:$0xff]
    %v193 = vld [vmem:[#allocation5 + $0x218] sm:$0xff]
    %v194 = vld [vmem:[#allocation5 + $0x220] sm:$0xff]
    %v195 = vld [vmem:[#allocation5 + $0x228] sm:$0xff]
    %v196 = vld [vmem:[#allocation5 + $0x230] sm:$0xff]
    %v197 = vld [vmem:[#allocation5 + $0x238] sm:$0xff]
    %v198 = vld [vmem:[#allocation5 + $0x240] sm:$0xff]
    %v199 = vld [vmem:[#allocation5 + $0x248] sm:$0xff]
    %v200 = vld [vmem:[#allocation5 + $0x250] sm:$0xff]
    %v201 = vld [vmem:[#allocation5 + $0x258] sm:$0xff]
    %v202 = vld [vmem:[#allocation5 + $0x260] sm:$0xff]
    %v203 = vld [vmem:[#allocation5 + $0x268] sm:$0xff]
    %v204 = vld [vmem:[#allocation5 + $0x270] sm:$0xff]
    %v205 = vld [vmem:[#allocation5 + $0x278] sm:$0xff]
    %v206 = vld [vmem:[#allocation5 + $0x280] sm:$0xff]
    %v207 = vld [vmem:[#allocation5 + $0x288] sm:$0xff]
    %v208 = vld [vmem:[#allocation5 + $0x290] sm:$0xff]
    %v209 = vld [vmem:[#allocation5 + $0x298] sm:$0xff]
    %v210 = vld [vmem:[#allocation5 + $0x2a0] sm:$0xff]
    %v211 = vld [vmem:[#allocation5 + $0x2a8] sm:$0xff]
    %v212 = vld [vmem:[#allocation5 + $0x2b0] sm:$0xff]
    %v213 = vld [vmem:[#allocation5 + $0x2b8] sm:$0xff]
    %v214 = vld [vmem:[#allocation5 + $0x2c0] sm:$0xff]
    %v215 = vld [vmem:[#allocation5 + $0x2c8] sm:$0xff]
    %v216 = vld [vmem:[#allocation5 + $0x2d0] sm:$0xff]
    %v217 = vld [vmem:[#allocation5 + $0x2d8] sm:$0xff]
    %v218 = vld [vmem:[#allocation5 + $0x2e0] sm:$0xff]
    %v219 = vld [vmem:[#allocation5 + $0x2e8] sm:$0xff]
    %v220 = vld [vmem:[#allocation5 + $0x2f0] sm:$0xff]
    %v221 = vld [vmem:[#allocation5 + $0x2f8] sm:$0xff]
    %v222 = vld [vmem:[#allocation5 + $0x300] sm:$0xff]
    %v223 = vld [vmem:[#allocation5 + $0x308] sm:$0xff]
    %v224 = vld [vmem:[#allocation5 + $0x310] sm:$0xff]
    %v225 = vld [vmem:[#allocation5 + $0x318] sm:$0xff]
    %v226 = vld [vmem:[#allocation5 + $0x320] sm:$0xff]
    %v227 = vld [vmem:[#allocation5 + $0x328] sm:$0xff]
    %v228 = vld [vmem:[#allocation5 + $0x330] sm:$0xff]
    %v229 = vld [vmem:[#allocation5 + $0x338] sm:$0xff]
    %v230 = vld [vmem:[#allocation5 + $0x340] sm:$0xff]
    %v231 = vld [vmem:[#allocation5 + $0x348] sm:$0xff]
    %v232 = vld [vmem:[#allocation5 + $0x350] sm:$0xff]
    %v233 = vld [vmem:[#allocation5 + $0x358] sm:$0xff]
    %v234 = vld [vmem:[#allocation5 + $0x360] sm:$0xff]
    %v235 = vld [vmem:[#allocation5 + $0x368] sm:$0xff]
    %v236 = vld [vmem:[#allocation5 + $0x370] sm:$0xff]
    %v237 = vld [vmem:[#allocation5 + $0x378] sm:$0xff]
    %v238 = vld [vmem:[#allocation5 + $0x380] sm:$0xff]
    %v239 = vld [vmem:[#allocation5 + $0x388] sm:$0xff]
    %v240 = vld [vmem:[#allocation5 + $0x390] sm:$0xff]
    %v241 = vld [vmem:[#allocation5 + $0x398] sm:$0xff]
    %v242 = vld [vmem:[#allocation5 + $0x3a0] sm:$0xff]
    %v243 = vld [vmem:[#allocation5 + $0x3a8] sm:$0xff]
    %v244 = vld [vmem:[#allocation5 + $0x3b0] sm:$0xff]
    %v245 = vld [vmem:[#allocation5 + $0x3b8] sm:$0xff]
    %v246 = vld [vmem:[#allocation5 + $0x3c0] sm:$0xff]
    %v247 = vld [vmem:[#allocation5 + $0x3c8] sm:$0xff]
    %v248 = vld [vmem:[#allocation5 + $0x3d0] sm:$0xff]
    %v249 = vld [vmem:[#allocation5 + $0x3d8] sm:$0xff]
    %v250 = vld [vmem:[#allocation5 + $0x3e0] sm:$0xff]
    %v251 = vld [vmem:[#allocation5 + $0x3e8] sm:$0xff]
    %v252 = vld [vmem:[#allocation5 + $0x3f0] sm:$0xff]
    %v253 = vld [vmem:[#allocation5 + $0x3f8] sm:$0xff]
    %v254 = vld [vmem:[#allocation5 + $0x400] sm:$0xff]
    %v255 = vld [vmem:[#allocation5 + $0x408] sm:$0xff]
    %v256 = vld [vmem:[#allocation5 + $0x410] sm:$0xff]
    %v257 = vld [vmem:[#allocation5 + $0x418] sm:$0xff]
    %v258 = vld [vmem:[#allocation5 + $0x420] sm:$0xff]
    %v259 = vld [vmem:[#allocation5 + $0x428] sm:$0xff]
    %v260 = vld [vmem:[#allocation5 + $0x430] sm:$0xff]
    %v261 = vld [vmem:[#allocation5 + $0x438] sm:$0xff]
    %v262 = vld [vmem:[#allocation5 + $0x440] sm:$0xff]
    %v263 = vld [vmem:[#allocation5 + $0x448] sm:$0xff]
    %v264 = vld [vmem:[#allocation5 + $0x450] sm:$0xff]
    %v265 = vld [vmem:[#allocation5 + $0x458] sm:$0xff]
    %v266 = vld [vmem:[#allocation5 + $0x460] sm:$0xff]
    %v267 = vld [vmem:[#allocation5 + $0x468] sm:$0xff]
    %v268 = vld [vmem:[#allocation5 + $0x470] sm:$0xff]
    %v269 = vld [vmem:[#allocation5 + $0x478] sm:$0xff]
    %v270 = vld [vmem:[#allocation5 + $0x480] sm:$0xff]
    %v271 = vld [vmem:[#allocation5 + $0x488] sm:$0xff]
    %v272 = vld [vmem:[#allocation5 + $0x490] sm:$0xff]
    %v273 = vld [vmem:[#allocation5 + $0x498] sm:$0xff]
    %v274 = vld [vmem:[#allocation5 + $0x4a0] sm:$0xff]
    %v275 = vld [vmem:[#allocation5 + $0x4a8] sm:$0xff]
    %v276 = vld [vmem:[#allocation5 + $0x4b0] sm:$0xff]
    %v277 = vld [vmem:[#allocation5 + $0x4b8] sm:$0xff]
    %v278 = vld [vmem:[#allocation5 + $0x4c0] sm:$0xff]
    %v279 = vld [vmem:[#allocation5 + $0x4c8] sm:$0xff]
    %v280 = vld [vmem:[#allocation5 + $0x4d0] sm:$0xff]
    %v281 = vld [vmem:[#allocation5 + $0x4d8] sm:$0xff]
    %v282 = vld [vmem:[#allocation5 + $0x4e0] sm:$0xff]
    %v283 = vld [vmem:[#allocation5 + $0x4e8] sm:$0xff]
    %v284 = vld [vmem:[#allocation5 + $0x4f0] sm:$0xff]
    %v285 = vld [vmem:[#allocation5 + $0x4f8] sm:$0xff]
    %v286 = vld [vmem:[#allocation5 + $0x500] sm:$0xff]
    %v287 = vld [vmem:[#allocation5 + $0x508] sm:$0xff]
    %v288 = vld [vmem:[#allocation5 + $0x510] sm:$0xff]
    %v289 = vld [vmem:[#allocation5 + $0x518] sm:$0xff]
    %v290 = vld [vmem:[#allocation5 + $0x520] sm:$0xff]
    %v291 = vld [vmem:[#allocation5 + $0x528] sm:$0xff]
    %v292 = vld [vmem:[#allocation5 + $0x530] sm:$0xff]
    %v293 = vld [vmem:[#allocation5 + $0x538] sm:$0xff]
    %v294 = vld [vmem:[#allocation5 + $0x540] sm:$0xff]
    %v295 = vld [vmem:[#allocation5 + $0x548] sm:$0xff]
    %v296 = vld [vmem:[#allocation5 + $0x550] sm:$0xff]
    %v297 = vld [vmem:[#allocation5 + $0x558] sm:$0xff]
    %v298 = vld [vmem:[#allocation5 + $0x560] sm:$0xff]
    %v299 = vld [vmem:[#allocation5 + $0x568] sm:$0xff]
    %v300 = vld [vmem:[#allocation5 + $0x570] sm:$0xff]
    %v301 = vld [vmem:[#allocation5 + $0x578] sm:$0xff]
    %v302 = vld [vmem:[#allocation5 + $0x580] sm:$0xff]
    %v303 = vld [vmem:[#allocation5 + $0x588] sm:$0xff]
    %v304 = vld [vmem:[#allocation5 + $0x590] sm:$0xff]
    %v305 = vld [vmem:[#allocation5 + $0x598] sm:$0xff]
    %v306 = vld [vmem:[#allocation5 + $0x5a0] sm:$0xff]
    %v307 = vld [vmem:[#allocation5 + $0x5a8] sm:$0xff]
    %v308 = vld [vmem:[#allocation5 + $0x5b0] sm:$0xff]
    %v309 = vld [vmem:[#allocation5 + $0x5b8] sm:$0xff]
    %v310 = vld [vmem:[#allocation5 + $0x5c0] sm:$0xff]
    %v311 = vld [vmem:[#allocation5 + $0x5c8] sm:$0xff]
    %v312 = vld [vmem:[#allocation5 + $0x5d0] sm:$0xff]
    %v313 = vld [vmem:[#allocation5 + $0x5d8] sm:$0xff]
    %v314 = vld [vmem:[#allocation5 + $0x5e0] sm:$0xff]
    %v315 = vld [vmem:[#allocation5 + $0x5e8] sm:$0xff]
    %v316 = vld [vmem:[#allocation5 + $0x5f0] sm:$0xff]
    %v317 = vld [vmem:[#allocation5 + $0x5f8] sm:$0xff]
    %v318 = vld [vmem:[#allocation5 + $0x600] sm:$0xff]
    %v319 = vld [vmem:[#allocation5 + $0x608] sm:$0xff]
    %v320 = vld [vmem:[#allocation5 + $0x610] sm:$0xff]
    %v321 = vld [vmem:[#allocation5 + $0x618] sm:$0xff]
    %v322 = vld [vmem:[#allocation7] sm:$0xf]
    %v324 = vperm.slane %v322, 0
    %v325 = vperm.slane %v322, 1
    %v326 = vperm.slane %v322, 2
    %v327 = vperm.slane %v322, 3
    %v340 = vunpack.c.l.b16 %v118
    %v341 = vunpack.c.h.b16 %v118
    %v342 = vunpack.c.l.b16 %v119
    %v343 = vunpack.c.h.b16 %v119
    %v344 = vunpack.c.l.b16 %v120
    %v345 = vunpack.c.h.b16 %v120
    %v346 = vunpack.c.l.b16 %v121
    %v347 = vunpack.c.l.b16 %v122
    %v348 = vunpack.c.h.b16 %v122
    %v349 = vunpack.c.l.b16 %v123
    %v350 = vunpack.c.h.b16 %v123
    %v351 = vunpack.c.l.b16 %v124
    %v352 = vunpack.c.h.b16 %v124
    %v353 = vunpack.c.l.b16 %v125
    %v354 = vpack.c.b16 %v347, %v340
    %v355 = vpack.c.b16 %v348, %v341
    %v356 = vpack.c.b16 %v349, %v342
    %v357 = vpack.c.b16 %v350, %v343
    %v358 = vpack.c.b16 %v351, %v344
    %v359 = vpack.c.b16 %v352, %v345
    %v360 = vpack.c.b16 %v353, %v346
    %v563 = vunpack.c.l.b16 %v126
    %v564 = vunpack.c.h.b16 %v126
    %v565 = vunpack.c.l.b16 %v127
    %v566 = vunpack.c.h.b16 %v127
    %v567 = vunpack.c.l.b16 %v128
    %v568 = vunpack.c.h.b16 %v128
    %v569 = vunpack.c.l.b16 %v129
    %v570 = vunpack.c.h.b16 %v129
    %v571 = vunpack.c.l.b16 %v130
    %v572 = vunpack.c.h.b16 %v130
    %v573 = vunpack.c.l.b16 %v131
    %v574 = vunpack.c.h.b16 %v131
    %v575 = vunpack.c.l.b16 %v132
    %v576 = vunpack.c.h.b16 %v132
    %v577 = vunpack.c.l.b16 %v133
    %v578 = vunpack.c.h.b16 %v133
    %v579 = vunpack.c.l.b16 %v134
    %v580 = vunpack.c.h.b16 %v134
    %v581 = vunpack.c.l.b16 %v135
    %v582 = vunpack.c.h.b16 %v135
    %v583 = vunpack.c.l.b16 %v136
    %v584 = vunpack.c.h.b16 %v136
    %v585 = vunpack.c.l.b16 %v137
    %v586 = vunpack.c.h.b16 %v137
    %v587 = vunpack.c.l.b16 %v138
    %v588 = vunpack.c.h.b16 %v138
    %v589 = vunpack.c.l.b16 %v139
    %v590 = vunpack.c.h.b16 %v139
    %v591 = vunpack.c.l.b16 %v140
    %v592 = vunpack.c.h.b16 %v140
    %v593 = vunpack.c.l.b16 %v141
    %v594 = vunpack.c.h.b16 %v141
    %v595 = vunpack.c.l.b16 %v142
    %v596 = vunpack.c.h.b16 %v142
    %v597 = vunpack.c.l.b16 %v143
    %v598 = vunpack.c.h.b16 %v143
    %v599 = vunpack.c.l.b16 %v144
    %v600 = vunpack.c.h.b16 %v144
    %v601 = vunpack.c.l.b16 %v145
    %v602 = vunpack.c.h.b16 %v145
    %v603 = vunpack.c.l.b16 %v146
    %v604 = vunpack.c.h.b16 %v146
    %v605 = vunpack.c.l.b16 %v147
    %v606 = vunpack.c.h.b16 %v147
    %v607 = vunpack.c.l.b16 %v148
    %v608 = vunpack.c.h.b16 %v148
    %v609 = vunpack.c.l.b16 %v149
    %v610 = vunpack.c.h.b16 %v149
    %v611 = vunpack.c.l.b16 %v150
    %v612 = vunpack.c.h.b16 %v150
    %v613 = vunpack.c.l.b16 %v151
    %v614 = vunpack.c.h.b16 %v151
    %v615 = vunpack.c.l.b16 %v152
    %v616 = vunpack.c.h.b16 %v152
    %v617 = vunpack.c.l.b16 %v153
    %v618 = vunpack.c.h.b16 %v153
    %v619 = vunpack.c.l.b16 %v154
    %v620 = vunpack.c.h.b16 %v154
    %v621 = vunpack.c.l.b16 %v155
    %v622 = vunpack.c.h.b16 %v155
    %v623 = vunpack.c.l.b16 %v156
    %v624 = vunpack.c.h.b16 %v156
    %v625 = vunpack.c.l.b16 %v157
    %v626 = vunpack.c.h.b16 %v157
    %v627 = vunpack.c.l.b16 %v158
    %v628 = vunpack.c.h.b16 %v158
    %v629 = vunpack.c.l.b16 %v159
    %v630 = vunpack.c.h.b16 %v159
    %v631 = vunpack.c.l.b16 %v160
    %v632 = vunpack.c.h.b16 %v160
    %v633 = vunpack.c.l.b16 %v161
    %v634 = vunpack.c.h.b16 %v161
    %v635 = vunpack.c.l.b16 %v162
    %v636 = vunpack.c.h.b16 %v162
    %v637 = vunpack.c.l.b16 %v163
    %v638 = vunpack.c.h.b16 %v163
    %v639 = vunpack.c.l.b16 %v164
    %v640 = vunpack.c.h.b16 %v164
    %v641 = vunpack.c.l.b16 %v165
    %v642 = vunpack.c.h.b16 %v165
    %v643 = vunpack.c.l.b16 %v166
    %v644 = vunpack.c.h.b16 %v166
    %v645 = vunpack.c.l.b16 %v167
    %v646 = vunpack.c.h.b16 %v167
    %v647 = vunpack.c.l.b16 %v168
    %v648 = vunpack.c.h.b16 %v168
    %v649 = vunpack.c.l.b16 %v169
    %v650 = vunpack.c.h.b16 %v169
    %v651 = vunpack.c.l.b16 %v170
    %v652 = vunpack.c.h.b16 %v170
    %v653 = vunpack.c.l.b16 %v171
    %v654 = vunpack.c.h.b16 %v171
    %v655 = vunpack.c.l.b16 %v172
    %v656 = vunpack.c.h.b16 %v172
    %v657 = vunpack.c.l.b16 %v173
    %v658 = vunpack.c.h.b16 %v173
    %v659 = vunpack.c.l.b16 %v174
    %v660 = vunpack.c.h.b16 %v174
    %v661 = vunpack.c.l.b16 %v175
    %v662 = vunpack.c.h.b16 %v175
    %v663 = vunpack.c.l.b16 %v176
    %v664 = vunpack.c.h.b16 %v176
    %v665 = vunpack.c.l.b16 %v177
    %v666 = vunpack.c.h.b16 %v177
    %v667 = vunpack.c.l.b16 %v178
    %v668 = vunpack.c.h.b16 %v178
    %v669 = vunpack.c.l.b16 %v179
    %v670 = vunpack.c.h.b16 %v179
    %v671 = vunpack.c.l.b16 %v180
    %v672 = vunpack.c.h.b16 %v180
    %v673 = vunpack.c.l.b16 %v181
    %v674 = vunpack.c.h.b16 %v181
    %v675 = vunpack.c.l.b16 %v182
    %v676 = vunpack.c.h.b16 %v182
    %v677 = vunpack.c.l.b16 %v183
    %v678 = vunpack.c.h.b16 %v183
    %v679 = vunpack.c.l.b16 %v184
    %v680 = vunpack.c.h.b16 %v184
    %v681 = vunpack.c.l.b16 %v185
    %v682 = vunpack.c.h.b16 %v185
    %v683 = vunpack.c.l.b16 %v186
    %v684 = vunpack.c.h.b16 %v186
    %v685 = vunpack.c.l.b16 %v187
    %v686 = vunpack.c.h.b16 %v187
    %v687 = vunpack.c.l.b16 %v188
    %v688 = vunpack.c.h.b16 %v188
    %v689 = vunpack.c.l.b16 %v189
    %v690 = vunpack.c.h.b16 %v189
    %v691 = vunpack.c.l.b16 %v190
    %v692 = vunpack.c.h.b16 %v190
    %v693 = vunpack.c.l.b16 %v191
    %v694 = vunpack.c.h.b16 %v191
    %v695 = vunpack.c.l.b16 %v192
    %v696 = vunpack.c.h.b16 %v192
    %v697 = vunpack.c.l.b16 %v193
    %v698 = vunpack.c.h.b16 %v193
    %v699 = vunpack.c.l.b16 %v194
    %v700 = vunpack.c.h.b16 %v194
    %v701 = vunpack.c.l.b16 %v195
    %v702 = vunpack.c.h.b16 %v195
    %v703 = vunpack.c.l.b16 %v196
    %v704 = vunpack.c.h.b16 %v196
    %v705 = vunpack.c.l.b16 %v197
    %v706 = vunpack.c.h.b16 %v197
    %v707 = vunpack.c.l.b16 %v198
    %v708 = vunpack.c.h.b16 %v198
    %v709 = vunpack.c.l.b16 %v199
    %v710 = vunpack.c.h.b16 %v199
    %v711 = vunpack.c.l.b16 %v200
    %v712 = vunpack.c.h.b16 %v200
    %v713 = vunpack.c.l.b16 %v201
    %v714 = vunpack.c.h.b16 %v201
    %v715 = vunpack.c.l.b16 %v202
    %v716 = vunpack.c.h.b16 %v202
    %v717 = vunpack.c.l.b16 %v203
    %v718 = vunpack.c.h.b16 %v203
    %v719 = vunpack.c.l.b16 %v204
    %v720 = vunpack.c.h.b16 %v204
    %v721 = vunpack.c.l.b16 %v205
    %v722 = vunpack.c.h.b16 %v205
    %v723 = vunpack.c.l.b16 %v206
    %v724 = vunpack.c.h.b16 %v206
    %v725 = vunpack.c.l.b16 %v207
    %v726 = vunpack.c.h.b16 %v207
    %v727 = vunpack.c.l.b16 %v208
    %v728 = vunpack.c.h.b16 %v208
    %v729 = vunpack.c.l.b16 %v209
    %v730 = vunpack.c.h.b16 %v209
    %v731 = vunpack.c.l.b16 %v210
    %v732 = vunpack.c.h.b16 %v210
    %v733 = vunpack.c.l.b16 %v211
    %v734 = vunpack.c.h.b16 %v211
    %v735 = vunpack.c.l.b16 %v212
    %v736 = vunpack.c.h.b16 %v212
    %v737 = vunpack.c.l.b16 %v213
    %v738 = vunpack.c.h.b16 %v213
    %v739 = vunpack.c.l.b16 %v214
    %v740 = vunpack.c.h.b16 %v214
    %v741 = vunpack.c.l.b16 %v215
    %v742 = vunpack.c.h.b16 %v215
    %v743 = vunpack.c.l.b16 %v216
    %v744 = vunpack.c.h.b16 %v216
    %v745 = vunpack.c.l.b16 %v217
    %v746 = vunpack.c.h.b16 %v217
    %v747 = vunpack.c.l.b16 %v218
    %v748 = vunpack.c.h.b16 %v218
    %v749 = vunpack.c.l.b16 %v219
    %v750 = vunpack.c.h.b16 %v219
    %v751 = vunpack.c.l.b16 %v220
    %v752 = vunpack.c.h.b16 %v220
    %v753 = vunpack.c.l.b16 %v221
    %v754 = vunpack.c.h.b16 %v221
    %v755 = vunpack.c.l.b16 %v222
    %v756 = vunpack.c.h.b16 %v222
    %v757 = vunpack.c.l.b16 %v223
    %v758 = vunpack.c.h.b16 %v223
    %v759 = vunpack.c.l.b16 %v224
    %v760 = vunpack.c.h.b16 %v224
    %v761 = vunpack.c.l.b16 %v225
    %v762 = vunpack.c.h.b16 %v225
    %v763 = vunpack.c.l.b16 %v226
    %v764 = vunpack.c.h.b16 %v226
    %v765 = vunpack.c.l.b16 %v227
    %v766 = vunpack.c.h.b16 %v227
    %v767 = vunpack.c.l.b16 %v228
    %v768 = vunpack.c.h.b16 %v228
    %v769 = vunpack.c.l.b16 %v229
    %v770 = vunpack.c.h.b16 %v229
    %v771 = vunpack.c.l.b16 %v230
    %v772 = vunpack.c.h.b16 %v230
    %v773 = vunpack.c.l.b16 %v231
    %v774 = vunpack.c.h.b16 %v231
    %v775 = vunpack.c.l.b16 %v232
    %v776 = vunpack.c.h.b16 %v232
    %v777 = vunpack.c.l.b16 %v233
    %v778 = vunpack.c.h.b16 %v233
    %v779 = vunpack.c.l.b16 %v234
    %v780 = vunpack.c.h.b16 %v234
    %v781 = vunpack.c.l.b16 %v235
    %v782 = vunpack.c.h.b16 %v235
    %v783 = vunpack.c.l.b16 %v236
    %v784 = vunpack.c.h.b16 %v236
    %v785 = vunpack.c.l.b16 %v237
    %v786 = vunpack.c.h.b16 %v237
    %v787 = vunpack.c.l.b16 %v238
    %v788 = vunpack.c.h.b16 %v238
    %v789 = vunpack.c.l.b16 %v239
    %v790 = vunpack.c.h.b16 %v239
    %v791 = vunpack.c.l.b16 %v240
    %v792 = vunpack.c.h.b16 %v240
    %v793 = vunpack.c.l.b16 %v241
    %v794 = vunpack.c.h.b16 %v241
    %v795 = vunpack.c.l.b16 %v242
    %v796 = vunpack.c.h.b16 %v242
    %v797 = vunpack.c.l.b16 %v243
    %v798 = vunpack.c.h.b16 %v243
    %v799 = vunpack.c.l.b16 %v244
    %v800 = vunpack.c.h.b16 %v244
    %v801 = vunpack.c.l.b16 %v245
    %v802 = vunpack.c.h.b16 %v245
    %v803 = vunpack.c.l.b16 %v246
    %v804 = vunpack.c.h.b16 %v246
    %v805 = vunpack.c.l.b16 %v247
    %v806 = vunpack.c.h.b16 %v247
    %v807 = vunpack.c.l.b16 %v248
    %v808 = vunpack.c.h.b16 %v248
    %v809 = vunpack.c.l.b16 %v249
    %v810 = vunpack.c.h.b16 %v249
    %v811 = vunpack.c.l.b16 %v250
    %v812 = vunpack.c.h.b16 %v250
    %v813 = vunpack.c.l.b16 %v251
    %v814 = vunpack.c.h.b16 %v251
    %v815 = vunpack.c.l.b16 %v252
    %v816 = vunpack.c.h.b16 %v252
    %v817 = vunpack.c.l.b16 %v253
    %v818 = vunpack.c.h.b16 %v253
    %v819 = vunpack.c.l.b16 %v254
    %v820 = vunpack.c.h.b16 %v254
    %v821 = vunpack.c.l.b16 %v255
    %v822 = vunpack.c.h.b16 %v255
    %v823 = vunpack.c.l.b16 %v256
    %v824 = vunpack.c.h.b16 %v256
    %v825 = vunpack.c.l.b16 %v257
    %v826 = vunpack.c.h.b16 %v257
    %v827 = vunpack.c.l.b16 %v258
    %v828 = vunpack.c.h.b16 %v258
    %v829 = vunpack.c.l.b16 %v259
    %v830 = vunpack.c.h.b16 %v259
    %v831 = vunpack.c.l.b16 %v260
    %v832 = vunpack.c.h.b16 %v260
    %v833 = vunpack.c.l.b16 %v261
    %v834 = vunpack.c.h.b16 %v261
    %v835 = vunpack.c.l.b16 %v262
    %v836 = vunpack.c.h.b16 %v262
    %v837 = vunpack.c.l.b16 %v263
    %v838 = vunpack.c.h.b16 %v263
    %v839 = vunpack.c.l.b16 %v264
    %v840 = vunpack.c.h.b16 %v264
    %v841 = vunpack.c.l.b16 %v265
    %v842 = vunpack.c.h.b16 %v265
    %v843 = vunpack.c.l.b16 %v266
    %v844 = vunpack.c.h.b16 %v266
    %v845 = vunpack.c.l.b16 %v267
    %v846 = vunpack.c.h.b16 %v267
    %v847 = vunpack.c.l.b16 %v268
    %v848 = vunpack.c.h.b16 %v268
    %v849 = vunpack.c.l.b16 %v269
    %v850 = vunpack.c.h.b16 %v269
    %v851 = vunpack.c.l.b16 %v270
    %v852 = vunpack.c.h.b16 %v270
    %v853 = vunpack.c.l.b16 %v271
    %v854 = vunpack.c.h.b16 %v271
    %v855 = vunpack.c.l.b16 %v272
    %v856 = vunpack.c.h.b16 %v272
    %v857 = vunpack.c.l.b16 %v273
    %v858 = vunpack.c.h.b16 %v273
    %v859 = vunpack.c.l.b16 %v274
    %v860 = vunpack.c.h.b16 %v274
    %v861 = vunpack.c.l.b16 %v275
    %v862 = vunpack.c.h.b16 %v275
    %v863 = vunpack.c.l.b16 %v276
    %v864 = vunpack.c.h.b16 %v276
    %v865 = vunpack.c.l.b16 %v277
    %v866 = vunpack.c.h.b16 %v277
    %v867 = vunpack.c.l.b16 %v278
    %v868 = vunpack.c.h.b16 %v278
    %v869 = vunpack.c.l.b16 %v279
    %v870 = vunpack.c.h.b16 %v279
    %v871 = vunpack.c.l.b16 %v280
    %v872 = vunpack.c.h.b16 %v280
    %v873 = vunpack.c.l.b16 %v281
    %v874 = vunpack.c.h.b16 %v281
    %v875 = vunpack.c.l.b16 %v282
    %v876 = vunpack.c.h.b16 %v282
    %v877 = vunpack.c.l.b16 %v283
    %v878 = vunpack.c.h.b16 %v283
    %v879 = vunpack.c.l.b16 %v284
    %v880 = vunpack.c.h.b16 %v284
    %v881 = vunpack.c.l.b16 %v285
    %v882 = vunpack.c.h.b16 %v285
    %v883 = vunpack.c.l.b16 %v286
    %v884 = vunpack.c.h.b16 %v286
    %v885 = vunpack.c.l.b16 %v287
    %v886 = vunpack.c.h.b16 %v287
    %v887 = vunpack.c.l.b16 %v288
    %v888 = vunpack.c.h.b16 %v288
    %v889 = vunpack.c.l.b16 %v289
    %v890 = vunpack.c.h.b16 %v289
    %v891 = vunpack.c.l.b16 %v290
    %v892 = vunpack.c.h.b16 %v290
    %v893 = vunpack.c.l.b16 %v291
    %v894 = vunpack.c.h.b16 %v291
    %v895 = vunpack.c.l.b16 %v292
    %v896 = vunpack.c.h.b16 %v292
    %v897 = vunpack.c.l.b16 %v293
    %v898 = vunpack.c.h.b16 %v293
    %v899 = vunpack.c.l.b16 %v294
    %v900 = vunpack.c.h.b16 %v294
    %v901 = vunpack.c.l.b16 %v295
    %v902 = vunpack.c.h.b16 %v295
    %v903 = vunpack.c.l.b16 %v296
    %v904 = vunpack.c.h.b16 %v296
    %v905 = vunpack.c.l.b16 %v297
    %v906 = vunpack.c.h.b16 %v297
    %v907 = vunpack.c.l.b16 %v298
    %v908 = vunpack.c.h.b16 %v298
    %v909 = vunpack.c.l.b16 %v299
    %v910 = vunpack.c.h.b16 %v299
    %v911 = vunpack.c.l.b16 %v300
    %v912 = vunpack.c.h.b16 %v300
    %v913 = vunpack.c.l.b16 %v301
    %v914 = vunpack.c.h.b16 %v301
    %v915 = vunpack.c.l.b16 %v302
    %v916 = vunpack.c.h.b16 %v302
    %v917 = vunpack.c.l.b16 %v303
    %v918 = vunpack.c.h.b16 %v303
    %v919 = vunpack.c.l.b16 %v304
    %v920 = vunpack.c.h.b16 %v304
    %v921 = vunpack.c.l.b16 %v305
    %v922 = vunpack.c.h.b16 %v305
    %v923 = vunpack.c.l.b16 %v306
    %v924 = vunpack.c.h.b16 %v306
    %v925 = vunpack.c.l.b16 %v307
    %v926 = vunpack.c.h.b16 %v307
    %v927 = vunpack.c.l.b16 %v308
    %v928 = vunpack.c.h.b16 %v308
    %v929 = vunpack.c.l.b16 %v309
    %v930 = vunpack.c.h.b16 %v309
    %v931 = vunpack.c.l.b16 %v310
    %v932 = vunpack.c.h.b16 %v310
    %v933 = vunpack.c.l.b16 %v311
    %v934 = vunpack.c.h.b16 %v311
    %v935 = vunpack.c.l.b16 %v312
    %v936 = vunpack.c.h.b16 %v312
    %v937 = vunpack.c.l.b16 %v313
    %v938 = vunpack.c.h.b16 %v313
    %v939 = vunpack.c.l.b16 %v314
    %v940 = vunpack.c.h.b16 %v314
    %v941 = vunpack.c.l.b16 %v315
    %v942 = vunpack.c.h.b16 %v315
    %v943 = vunpack.c.l.b16 %v316
    %v944 = vunpack.c.h.b16 %v316
    %v945 = vunpack.c.l.b16 %v317
    %v946 = vunpack.c.h.b16 %v317
    %v947 = vunpack.c.l.b16 %v318
    %v948 = vunpack.c.h.b16 %v318
    %v949 = vunpack.c.l.b16 %v319
    %v950 = vunpack.c.h.b16 %v319
    %v951 = vunpack.c.l.b16 %v320
    %v952 = vunpack.c.h.b16 %v320
    %v953 = vunpack.c.l.b16 %v321
    %v954 = vunpack.c.h.b16 %v321
    %v955 = vpack.c.b16 %v567, %v563
    %v956 = vpack.c.b16 %v568, %v564
    %v957 = vpack.c.b16 %v569, %v565
    %v958 = vpack.c.b16 %v570, %v566
    %v959 = vpack.c.b16 %v575, %v571
    %v960 = vpack.c.b16 %v576, %v572
    %v961 = vpack.c.b16 %v577, %v573
    %v962 = vpack.c.b16 %v578, %v574
    %v963 = vpack.c.b16 %v583, %v579
    %v964 = vpack.c.b16 %v584, %v580
    %v965 = vpack.c.b16 %v585, %v581
    %v966 = vpack.c.b16 %v586, %v582
    %v967 = vpack.c.b16 %v591, %v587
    %v968 = vpack.c.b16 %v592, %v588
    %v969 = vpack.c.b16 %v593, %v589
    %v970 = vpack.c.b16 %v594, %v590
    %v971 = vpack.c.b16 %v599, %v595
    %v972 = vpack.c.b16 %v600, %v596
    %v973 = vpack.c.b16 %v601, %v597
    %v974 = vpack.c.b16 %v602, %v598
    %v975 = vpack.c.b16 %v607, %v603
    %v976 = vpack.c.b16 %v608, %v604
    %v977 = vpack.c.b16 %v609, %v605
    %v978 = vpack.c.b16 %v610, %v606
    %v979 = vpack.c.b16 %v615, %v611
    %v980 = vpack.c.b16 %v616, %v612
    %v981 = vpack.c.b16 %v617, %v613
    %v982 = vpack.c.b16 %v618, %v614
    %v983 = vpack.c.b16 %v623, %v619
    %v984 = vpack.c.b16 %v624, %v620
    %v985 = vpack.c.b16 %v625, %v621
    %v986 = vpack.c.b16 %v626, %v622
    %v987 = vpack.c.b16 %v631, %v627
    %v988 = vpack.c.b16 %v632, %v628
    %v989 = vpack.c.b16 %v633, %v629
    %v990 = vpack.c.b16 %v634, %v630
    %v991 = vpack.c.b16 %v639, %v635
    %v992 = vpack.c.b16 %v640, %v636
    %v993 = vpack.c.b16 %v641, %v637
    %v994 = vpack.c.b16 %v642, %v638
    %v995 = vpack.c.b16 %v647, %v643
    %v996 = vpack.c.b16 %v648, %v644
    %v997 = vpack.c.b16 %v649, %v645
    %v998 = vpack.c.b16 %v650, %v646
    %v999 = vpack.c.b16 %v655, %v651
    %v1000 = vpack.c.b16 %v656, %v652
    %v1001 = vpack.c.b16 %v657, %v653
    %v1002 = vpack.c.b16 %v658, %v654
    %v1003 = vpack.c.b16 %v663, %v659
    %v1004 = vpack.c.b16 %v664, %v660
    %v1005 = vpack.c.b16 %v665, %v661
    %v1006 = vpack.c.b16 %v666, %v662
    %v1007 = vpack.c.b16 %v671, %v667
    %v1008 = vpack.c.b16 %v672, %v668
    %v1009 = vpack.c.b16 %v673, %v669
    %v1010 = vpack.c.b16 %v674, %v670
    %v1011 = vpack.c.b16 %v679, %v675
    %v1012 = vpack.c.b16 %v680, %v676
    %v1013 = vpack.c.b16 %v681, %v677
    %v1014 = vpack.c.b16 %v682, %v678
    %v1015 = vpack.c.b16 %v687, %v683
    %v1016 = vpack.c.b16 %v688, %v684
    %v1017 = vpack.c.b16 %v689, %v685
    %v1018 = vpack.c.b16 %v690, %v686
    %v1019 = vpack.c.b16 %v695, %v691
    %v1020 = vpack.c.b16 %v696, %v692
    %v1021 = vpack.c.b16 %v697, %v693
    %v1022 = vpack.c.b16 %v698, %v694
    %v1023 = vpack.c.b16 %v703, %v699
    %v1024 = vpack.c.b16 %v704, %v700
    %v1025 = vpack.c.b16 %v705, %v701
    %v1026 = vpack.c.b16 %v706, %v702
    %v1027 = vpack.c.b16 %v711, %v707
    %v1028 = vpack.c.b16 %v712, %v708
    %v1029 = vpack.c.b16 %v713, %v709
    %v1030 = vpack.c.b16 %v714, %v710
    %v1031 = vpack.c.b16 %v719, %v715
    %v1032 = vpack.c.b16 %v720, %v716
    %v1033 = vpack.c.b16 %v721, %v717
    %v1034 = vpack.c.b16 %v722, %v718
    %v1035 = vpack.c.b16 %v727, %v723
    %v1036 = vpack.c.b16 %v728, %v724
    %v1037 = vpack.c.b16 %v729, %v725
    %v1038 = vpack.c.b16 %v730, %v726
    %v1039 = vpack.c.b16 %v735, %v731
    %v1040 = vpack.c.b16 %v736, %v732
    %v1041 = vpack.c.b16 %v737, %v733
    %v1042 = vpack.c.b16 %v738, %v734
    %v1043 = vpack.c.b16 %v743, %v739
    %v1044 = vpack.c.b16 %v744, %v740
    %v1045 = vpack.c.b16 %v745, %v741
    %v1046 = vpack.c.b16 %v746, %v742
    %v1047 = vpack.c.b16 %v751, %v747
    %v1048 = vpack.c.b16 %v752, %v748
    %v1049 = vpack.c.b16 %v753, %v749
    %v1050 = vpack.c.b16 %v754, %v750
    %v1051 = vpack.c.b16 %v759, %v755
    %v1052 = vpack.c.b16 %v760, %v756
    %v1053 = vpack.c.b16 %v761, %v757
    %v1054 = vpack.c.b16 %v762, %v758
    %v1055 = vpack.c.b16 %v767, %v763
    %v1056 = vpack.c.b16 %v768, %v764
    %v1057 = vpack.c.b16 %v769, %v765
    %v1058 = vpack.c.b16 %v770, %v766
    %v1059 = vpack.c.b16 %v775, %v771
    %v1060 = vpack.c.b16 %v776, %v772
    %v1061 = vpack.c.b16 %v777, %v773
    %v1062 = vpack.c.b16 %v778, %v774
    %v1063 = vpack.c.b16 %v783, %v779
    %v1064 = vpack.c.b16 %v784, %v780
    %v1065 = vpack.c.b16 %v785, %v781
    %v1066 = vpack.c.b16 %v786, %v782
    %v1067 = vpack.c.b16 %v791, %v787
    %v1068 = vpack.c.b16 %v792, %v788
    %v1069 = vpack.c.b16 %v793, %v789
    %v1070 = vpack.c.b16 %v794, %v790
    %v1071 = vpack.c.b16 %v799, %v795
    %v1072 = vpack.c.b16 %v800, %v796
    %v1073 = vpack.c.b16 %v801, %v797
    %v1074 = vpack.c.b16 %v802, %v798
    %v1075 = vpack.c.b16 %v807, %v803
    %v1076 = vpack.c.b16 %v808, %v804
    %v1077 = vpack.c.b16 %v809, %v805
    %v1078 = vpack.c.b16 %v810, %v806
    %v1079 = vpack.c.b16 %v815, %v811
    %v1080 = vpack.c.b16 %v816, %v812
    %v1081 = vpack.c.b16 %v817, %v813
    %v1082 = vpack.c.b16 %v818, %v814
    %v1083 = vpack.c.b16 %v823, %v819
    %v1084 = vpack.c.b16 %v824, %v820
    %v1085 = vpack.c.b16 %v825, %v821
    %v1086 = vpack.c.b16 %v826, %v822
    %v1087 = vpack.c.b16 %v831, %v827
    %v1088 = vpack.c.b16 %v832, %v828
    %v1089 = vpack.c.b16 %v833, %v829
    %v1090 = vpack.c.b16 %v834, %v830
    %v1091 = vpack.c.b16 %v839, %v835
    %v1092 = vpack.c.b16 %v840, %v836
    %v1093 = vpack.c.b16 %v841, %v837
    %v1094 = vpack.c.b16 %v842, %v838
    %v1095 = vpack.c.b16 %v847, %v843
    %v1096 = vpack.c.b16 %v848, %v844
    %v1097 = vpack.c.b16 %v849, %v845
    %v1098 = vpack.c.b16 %v850, %v846
    %v1099 = vpack.c.b16 %v855, %v851
    %v1100 = vpack.c.b16 %v856, %v852
    %v1101 = vpack.c.b16 %v857, %v853
    %v1102 = vpack.c.b16 %v858, %v854
    %v1103 = vpack.c.b16 %v863, %v859
    %v1104 = vpack.c.b16 %v864, %v860
    %v1105 = vpack.c.b16 %v865, %v861
    %v1106 = vpack.c.b16 %v866, %v862
    %v1107 = vpack.c.b16 %v871, %v867
    %v1108 = vpack.c.b16 %v872, %v868
    %v1109 = vpack.c.b16 %v873, %v869
    %v1110 = vpack.c.b16 %v874, %v870
    %v1111 = vpack.c.b16 %v879, %v875
    %v1112 = vpack.c.b16 %v880, %v876
    %v1113 = vpack.c.b16 %v881, %v877
    %v1114 = vpack.c.b16 %v882, %v878
    %v1115 = vpack.c.b16 %v887, %v883
    %v1116 = vpack.c.b16 %v888, %v884
    %v1117 = vpack.c.b16 %v889, %v885
    %v1118 = vpack.c.b16 %v890, %v886
    %v1119 = vpack.c.b16 %v895, %v891
    %v1120 = vpack.c.b16 %v896, %v892
    %v1121 = vpack.c.b16 %v897, %v893
    %v1122 = vpack.c.b16 %v898, %v894
    %v1123 = vpack.c.b16 %v903, %v899
    %v1124 = vpack.c.b16 %v904, %v900
    %v1125 = vpack.c.b16 %v905, %v901
    %v1126 = vpack.c.b16 %v906, %v902
    %v1127 = vpack.c.b16 %v911, %v907
    %v1128 = vpack.c.b16 %v912, %v908
    %v1129 = vpack.c.b16 %v913, %v909
    %v1130 = vpack.c.b16 %v914, %v910
    %v1131 = vpack.c.b16 %v919, %v915
    %v1132 = vpack.c.b16 %v920, %v916
    %v1133 = vpack.c.b16 %v921, %v917
    %v1134 = vpack.c.b16 %v922, %v918
    %v1135 = vpack.c.b16 %v927, %v923
    %v1136 = vpack.c.b16 %v928, %v924
    %v1137 = vpack.c.b16 %v929, %v925
    %v1138 = vpack.c.b16 %v930, %v926
    %v1139 = vpack.c.b16 %v935, %v931
    %v1140 = vpack.c.b16 %v936, %v932
    %v1141 = vpack.c.b16 %v937, %v933
    %v1142 = vpack.c.b16 %v938, %v934
    %v1143 = vpack.c.b16 %v943, %v939
    %v1144 = vpack.c.b16 %v944, %v940
    %v1145 = vpack.c.b16 %v945, %v941
    %v1146 = vpack.c.b16 %v946, %v942
    %v1147 = vpack.c.b16 %v951, %v947
    %v1148 = vpack.c.b16 %v952, %v948
    %v1149 = vpack.c.b16 %v953, %v949
    %v1150 = vpack.c.b16 %v954, %v950
    %vm1347 = vcmask 130048
    %v1349 = vsel %vm1347, %v360, 0
    %1351 = vmatpush.bf16.msra.mxu0 %v983
    %1352 = vmatpush.bf16.msra.mxu0 %v979
    %1353 = vmatpush.bf16.msra.mxu0 %v975
    %1354 = vmatpush.bf16.msra.mxu0 %v971
    %1355 = vmatpush.bf16.msra.mxu0 %v967
    %1356 = vmatpush.bf16.msra.mxu0 %v963
    %1357 = vmatpush.bf16.msra.mxu0 %v959
    %1358 = vmatpush.bf16.msra.mxu0 %v955
    %1359 = vmatmul.bf16.gmra.mxu0 %v354
    %v1360 = vpop.f32.mrf.mxu0
    %v1361 = vadd.f32 %v324, %v1360
    %v1362 = vpop.f32.mrf.mxu0
    %v1363 = vadd.f32 %v324, %v1362
    %1364 = vdwg.mxu0
    %1365 = vmatpush.bf16.msra.mxu0 %v1015
    %1366 = vmatpush.bf16.msra.mxu0 %v1011
    %1367 = vmatpush.bf16.msra.mxu0 %v1007
    %1368 = vmatpush.bf16.msra.mxu0 %v1003
    %1369 = vmatpush.bf16.msra.mxu0 %v999
    %1370 = vmatpush.bf16.msra.mxu0 %v995
    %1371 = vmatpush.bf16.msra.mxu0 %v991
    %1372 = vmatpush.bf16.msra.mxu0 %v987
    %1373 = vmatmul.bf16.gmra.mxu0 %v355
    %v1374 = vpop.f32.mrf.mxu0
    %v1375 = vadd.f32 %v1361, %v1374
    %v1376 = vpop.f32.mrf.mxu0
    %v1377 = vadd.f32 %v1363, %v1376
    %1378 = vdwg.mxu0
    %1379 = vmatpush.bf16.msra.mxu0 %v1047
    %1380 = vmatpush.bf16.msra.mxu0 %v1043
    %1381 = vmatpush.bf16.msra.mxu0 %v1039
    %1382 = vmatpush.bf16.msra.mxu0 %v1035
    %1383 = vmatpush.bf16.msra.mxu0 %v1031
    %1384 = vmatpush.bf16.msra.mxu0 %v1027
    %1385 = vmatpush.bf16.msra.mxu0 %v1023
    %1386 = vmatpush.bf16.msra.mxu0 %v1019
    %1387 = vmatmul.bf16.gmra.mxu0 %v356
    %v1388 = vpop.f32.mrf.mxu0
    %v1389 = vadd.f32 %v1375, %v1388
    %v1390 = vpop.f32.mrf.mxu0
    %v1391 = vadd.f32 %v1377, %v1390
    %1392 = vdwg.mxu0
    %1393 = vmatpush.bf16.msra.mxu0 %v1079
    %1394 = vmatpush.bf16.msra.mxu0 %v1075
    %1395 = vmatpush.bf16.msra.mxu0 %v1071
    %1396 = vmatpush.bf16.msra.mxu0 %v1067
    %1397 = vmatpush.bf16.msra.mxu0 %v1063
    %1398 = vmatpush.bf16.msra.mxu0 %v1059
    %1399 = vmatpush.bf16.msra.mxu0 %v1055
    %1400 = vmatpush.bf16.msra.mxu0 %v1051
    %1401 = vmatmul.bf16.gmra.mxu0 %v357
    %v1402 = vpop.f32.mrf.mxu0
    %v1403 = vadd.f32 %v1389, %v1402
    %v1404 = vpop.f32.mrf.mxu0
    %v1405 = vadd.f32 %v1391, %v1404
    %1406 = vdwg.mxu0
    %1407 = vmatpush.bf16.msra.mxu0 %v1111
    %1408 = vmatpush.bf16.msra.mxu0 %v1107
    %1409 = vmatpush.bf16.msra.mxu0 %v1103
    %1410 = vmatpush.bf16.msra.mxu0 %v1099
    %1411 = vmatpush.bf16.msra.mxu0 %v1095
    %1412 = vmatpush.bf16.msra.mxu0 %v1091
    %1413 = vmatpush.bf16.msra.mxu0 %v1087
    %1414 = vmatpush.bf16.msra.mxu0 %v1083
    %1415 = vmatmul.bf16.gmra.mxu0 %v358
    %v1416 = vpop.f32.mrf.mxu0
    %v1417 = vadd.f32 %v1403, %v1416
    %v1418 = vpop.f32.mrf.mxu0
    %v1419 = vadd.f32 %v1405, %v1418
    %1420 = vdwg.mxu0
    %1421 = vmatpush.bf16.msra.mxu0 %v1143
    %1422 = vmatpush.bf16.msra.mxu0 %v1139
    %1423 = vmatpush.bf16.msra.mxu0 %v1135
    %1424 = vmatpush.bf16.msra.mxu0 %v1131
    %1425 = vmatpush.bf16.msra.mxu0 %v1127
    %1426 = vmatpush.bf16.msra.mxu0 %v1123
    %1427 = vmatpush.bf16.msra.mxu0 %v1119
    %1428 = vmatpush.bf16.msra.mxu0 %v1115
    %1429 = vmatmul.bf16.gmra.mxu0 %v359
    %v1430 = vpop.f32.mrf.mxu0
    %v1431 = vadd.f32 %v1417, %v1430
    %v1432 = vpop.f32.mrf.mxu0
    %v1433 = vadd.f32 %v1419, %v1432
    %1434 = vdwg.mxu0
    %1435 = vmatpush.bf16.msra.mxu0 0
    %1436 = vmatpush.bf16.msra.mxu0 0
    %1437 = vmatpush.bf16.msra.mxu0 0
    %1438 = vmatpush.bf16.msra.mxu0 0
    %1439 = vmatpush.bf16.msra.mxu0 0
    %1440 = vmatpush.bf16.msra.mxu0 0
    %1441 = vmatpush.bf16.msra.mxu0 0
    %1442 = vmatpush.bf16.msra.mxu0 %v1147
    %1443 = vmatmul.bf16.gmra.mxu0 %v1349
    %v1444 = vpop.f32.mrf.mxu0
    %v1445 = vadd.f32 %v1431, %v1444
    %v1446 = vpop.f32.mrf.mxu0
    %v1447 = vadd.f32 %v1433, %v1446
    %1448 = vdwg.mxu0
    %1449 = vmatpush.bf16.msra.mxu0 %v984
    %1450 = vmatpush.bf16.msra.mxu0 %v980
    %1451 = vmatpush.bf16.msra.mxu0 %v976
    %1452 = vmatpush.bf16.msra.mxu0 %v972
    %1453 = vmatpush.bf16.msra.mxu0 %v968
    %1454 = vmatpush.bf16.msra.mxu0 %v964
    %1455 = vmatpush.bf16.msra.mxu0 %v960
    %1456 = vmatpush.bf16.msra.mxu0 %v956
    %1457 = vmatmul.bf16.gmra.mxu0 %v354
    %v1458 = vpop.f32.mrf.mxu0
    %v1459 = vadd.f32 %v325, %v1458
    %v1460 = vpop.f32.mrf.mxu0
    %v1461 = vadd.f32 %v325, %v1460
    %1462 = vdwg.mxu0
    %1463 = vmatpush.bf16.msra.mxu0 %v1016
    %1464 = vmatpush.bf16.msra.mxu0 %v1012
    %1465 = vmatpush.bf16.msra.mxu0 %v1008
    %1466 = vmatpush.bf16.msra.mxu0 %v1004
    %1467 = vmatpush.bf16.msra.mxu0 %v1000
    %1468 = vmatpush.bf16.msra.mxu0 %v996
    %1469 = vmatpush.bf16.msra.mxu0 %v992
    %1470 = vmatpush.bf16.msra.mxu0 %v988
    %1471 = vmatmul.bf16.gmra.mxu0 %v355
    %v1472 = vpop.f32.mrf.mxu0
    %v1473 = vadd.f32 %v1459, %v1472
    %v1474 = vpop.f32.mrf.mxu0
    %v1475 = vadd.f32 %v1461, %v1474
    %1476 = vdwg.mxu0
    %1477 = vmatpush.bf16.msra.mxu0 %v1048
    %1478 = vmatpush.bf16.msra.mxu0 %v1044
    %1479 = vmatpush.bf16.msra.mxu0 %v1040
    %1480 = vmatpush.bf16.msra.mxu0 %v1036
    %1481 = vmatpush.bf16.msra.mxu0 %v1032
    %1482 = vmatpush.bf16.msra.mxu0 %v1028
    %1483 = vmatpush.bf16.msra.mxu0 %v1024
    %1484 = vmatpush.bf16.msra.mxu0 %v1020
    %1485 = vmatmul.bf16.gmra.mxu0 %v356
    %v1486 = vpop.f32.mrf.mxu0
    %v1487 = vadd.f32 %v1473, %v1486
    %v1488 = vpop.f32.mrf.mxu0
    %v1489 = vadd.f32 %v1475, %v1488
    %1490 = vdwg.mxu0
    %1491 = vmatpush.bf16.msra.mxu0 %v1080
    %1492 = vmatpush.bf16.msra.mxu0 %v1076
    %1493 = vmatpush.bf16.msra.mxu0 %v1072
    %1494 = vmatpush.bf16.msra.mxu0 %v1068
    %1495 = vmatpush.bf16.msra.mxu0 %v1064
    %1496 = vmatpush.bf16.msra.mxu0 %v1060
    %1497 = vmatpush.bf16.msra.mxu0 %v1056
    %1498 = vmatpush.bf16.msra.mxu0 %v1052
    %1499 = vmatmul.bf16.gmra.mxu0 %v357
    %v1500 = vpop.f32.mrf.mxu0
    %v1501 = vadd.f32 %v1487, %v1500
    %v1502 = vpop.f32.mrf.mxu0
    %v1503 = vadd.f32 %v1489, %v1502
    %1504 = vdwg.mxu0
    %1505 = vmatpush.bf16.msra.mxu0 %v1112
    %1506 = vmatpush.bf16.msra.mxu0 %v1108
    %1507 = vmatpush.bf16.msra.mxu0 %v1104
    %1508 = vmatpush.bf16.msra.mxu0 %v1100
    %1509 = vmatpush.bf16.msra.mxu0 %v1096
    %1510 = vmatpush.bf16.msra.mxu0 %v1092
    %1511 = vmatpush.bf16.msra.mxu0 %v1088
    %1512 = vmatpush.bf16.msra.mxu0 %v1084
    %1513 = vmatmul.bf16.gmra.mxu0 %v358
    %v1514 = vpop.f32.mrf.mxu0
    %v1515 = vadd.f32 %v1501, %v1514
    %v1516 = vpop.f32.mrf.mxu0
    %v1517 = vadd.f32 %v1503, %v1516
    %1518 = vdwg.mxu0
    %1519 = vmatpush.bf16.msra.mxu0 %v1144
    %1520 = vmatpush.bf16.msra.mxu0 %v1140
    %1521 = vmatpush.bf16.msra.mxu0 %v1136
    %1522 = vmatpush.bf16.msra.mxu0 %v1132
    %1523 = vmatpush.bf16.msra.mxu0 %v1128
    %1524 = vmatpush.bf16.msra.mxu0 %v1124
    %1525 = vmatpush.bf16.msra.mxu0 %v1120
    %1526 = vmatpush.bf16.msra.mxu0 %v1116
    %1527 = vmatmul.bf16.gmra.mxu0 %v359
    %v1528 = vpop.f32.mrf.mxu0
    %v1529 = vadd.f32 %v1515, %v1528
    %v1530 = vpop.f32.mrf.mxu0
    %v1531 = vadd.f32 %v1517, %v1530
    %1532 = vdwg.mxu0
    %1533 = vmatpush.bf16.msra.mxu0 0
    %1534 = vmatpush.bf16.msra.mxu0 0
    %1535 = vmatpush.bf16.msra.mxu0 0
    %1536 = vmatpush.bf16.msra.mxu0 0
    %1537 = vmatpush.bf16.msra.mxu0 0
    %1538 = vmatpush.bf16.msra.mxu0 0
    %1539 = vmatpush.bf16.msra.mxu0 0
    %1540 = vmatpush.bf16.msra.mxu0 %v1148
    %1541 = vmatmul.bf16.gmra.mxu0 %v1349
    %v1542 = vpop.f32.mrf.mxu0
    %v1543 = vadd.f32 %v1529, %v1542
    %v1544 = vpop.f32.mrf.mxu0
    %v1545 = vadd.f32 %v1531, %v1544
    %1546 = vdwg.mxu0
    %1547 = vmatpush.bf16.msra.mxu0 %v985
    %1548 = vmatpush.bf16.msra.mxu0 %v981
    %1549 = vmatpush.bf16.msra.mxu0 %v977
    %1550 = vmatpush.bf16.msra.mxu0 %v973
    %1551 = vmatpush.bf16.msra.mxu0 %v969
    %1552 = vmatpush.bf16.msra.mxu0 %v965
    %1553 = vmatpush.bf16.msra.mxu0 %v961
    %1554 = vmatpush.bf16.msra.mxu0 %v957
    %1555 = vmatmul.bf16.gmra.mxu0 %v354
    %v1556 = vpop.f32.mrf.mxu0
    %v1557 = vadd.f32 %v326, %v1556
    %v1558 = vpop.f32.mrf.mxu0
    %v1559 = vadd.f32 %v326, %v1558
    %1560 = vdwg.mxu0
    %1561 = vmatpush.bf16.msra.mxu0 %v1017
    %1562 = vmatpush.bf16.msra.mxu0 %v1013
    %1563 = vmatpush.bf16.msra.mxu0 %v1009
    %1564 = vmatpush.bf16.msra.mxu0 %v1005
    %1565 = vmatpush.bf16.msra.mxu0 %v1001
    %1566 = vmatpush.bf16.msra.mxu0 %v997
    %1567 = vmatpush.bf16.msra.mxu0 %v993
    %1568 = vmatpush.bf16.msra.mxu0 %v989
    %1569 = vmatmul.bf16.gmra.mxu0 %v355
    %v1570 = vpop.f32.mrf.mxu0
    %v1571 = vadd.f32 %v1557, %v1570
    %v1572 = vpop.f32.mrf.mxu0
    %v1573 = vadd.f32 %v1559, %v1572
    %1574 = vdwg.mxu0
    %1575 = vmatpush.bf16.msra.mxu0 %v1049
    %1576 = vmatpush.bf16.msra.mxu0 %v1045
    %1577 = vmatpush.bf16.msra.mxu0 %v1041
    %1578 = vmatpush.bf16.msra.mxu0 %v1037
    %1579 = vmatpush.bf16.msra.mxu0 %v1033
    %1580 = vmatpush.bf16.msra.mxu0 %v1029
    %1581 = vmatpush.bf16.msra.mxu0 %v1025
    %1582 = vmatpush.bf16.msra.mxu0 %v1021
    %1583 = vmatmul.bf16.gmra.mxu0 %v356
    %v1584 = vpop.f32.mrf.mxu0
    %v1585 = vadd.f32 %v1571, %v1584
    %v1586 = vpop.f32.mrf.mxu0
    %v1587 = vadd.f32 %v1573, %v1586
    %1588 = vdwg.mxu0
    %1589 = vmatpush.bf16.msra.mxu0 %v1081
    %1590 = vmatpush.bf16.msra.mxu0 %v1077
    %1591 = vmatpush.bf16.msra.mxu0 %v1073
    %1592 = vmatpush.bf16.msra.mxu0 %v1069
    %1593 = vmatpush.bf16.msra.mxu0 %v1065
    %1594 = vmatpush.bf16.msra.mxu0 %v1061
    %1595 = vmatpush.bf16.msra.mxu0 %v1057
    %1596 = vmatpush.bf16.msra.mxu0 %v1053
    %1597 = vmatmul.bf16.gmra.mxu0 %v357
    %v1598 = vpop.f32.mrf.mxu0
    %v1599 = vadd.f32 %v1585, %v1598
    %v1600 = vpop.f32.mrf.mxu0
    %v1601 = vadd.f32 %v1587, %v1600
    %1602 = vdwg.mxu0
    %1603 = vmatpush.bf16.msra.mxu0 %v1113
    %1604 = vmatpush.bf16.msra.mxu0 %v1109
    %1605 = vmatpush.bf16.msra.mxu0 %v1105
    %1606 = vmatpush.bf16.msra.mxu0 %v1101
    %1607 = vmatpush.bf16.msra.mxu0 %v1097
    %1608 = vmatpush.bf16.msra.mxu0 %v1093
    %1609 = vmatpush.bf16.msra.mxu0 %v1089
    %1610 = vmatpush.bf16.msra.mxu0 %v1085
    %1611 = vmatmul.bf16.gmra.mxu0 %v358
    %v1612 = vpop.f32.mrf.mxu0
    %v1613 = vadd.f32 %v1599, %v1612
    %v1614 = vpop.f32.mrf.mxu0
    %v1615 = vadd.f32 %v1601, %v1614
    %1616 = vdwg.mxu0
    %1617 = vmatpush.bf16.msra.mxu0 %v1145
    %1618 = vmatpush.bf16.msra.mxu0 %v1141
    %1619 = vmatpush.bf16.msra.mxu0 %v1137
    %1620 = vmatpush.bf16.msra.mxu0 %v1133
    %1621 = vmatpush.bf16.msra.mxu0 %v1129
    %1622 = vmatpush.bf16.msra.mxu0 %v1125
    %1623 = vmatpush.bf16.msra.mxu0 %v1121
    %1624 = vmatpush.bf16.msra.mxu0 %v1117
    %1625 = vmatmul.bf16.gmra.mxu0 %v359
    %v1626 = vpop.f32.mrf.mxu0
    %v1627 = vadd.f32 %v1613, %v1626
    %v1628 = vpop.f32.mrf.mxu0
    %v1629 = vadd.f32 %v1615, %v1628
    %1630 = vdwg.mxu0
    %1631 = vmatpush.bf16.msra.mxu0 0
    %1632 = vmatpush.bf16.msra.mxu0 0
    %1633 = vmatpush.bf16.msra.mxu0 0
    %1634 = vmatpush.bf16.msra.mxu0 0
    %1635 = vmatpush.bf16.msra.mxu0 0
    %1636 = vmatpush.bf16.msra.mxu0 0
    %1637 = vmatpush.bf16.msra.mxu0 0
    %1638 = vmatpush.bf16.msra.mxu0 %v1149
    %1639 = vmatmul.bf16.gmra.mxu0 %v1349
    %v1640 = vpop.f32.mrf.mxu0
    %v1641 = vadd.f32 %v1627, %v1640
    %v1642 = vpop.f32.mrf.mxu0
    %v1643 = vadd.f32 %v1629, %v1642
    %1644 = vdwg.mxu0
    %1645 = vmatpush.bf16.msra.mxu0 %v986
    %1646 = vmatpush.bf16.msra.mxu0 %v982
    %1647 = vmatpush.bf16.msra.mxu0 %v978
    %1648 = vmatpush.bf16.msra.mxu0 %v974
    %1649 = vmatpush.bf16.msra.mxu0 %v970
    %1650 = vmatpush.bf16.msra.mxu0 %v966
    %1651 = vmatpush.bf16.msra.mxu0 %v962
    %1652 = vmatpush.bf16.msra.mxu0 %v958
    %1653 = vmatmul.bf16.gmra.mxu0 %v354
    %v1654 = vpop.f32.mrf.mxu0
    %v1655 = vadd.f32 %v327, %v1654
    %v1656 = vpop.f32.mrf.mxu0
    %v1657 = vadd.f32 %v327, %v1656
    %1658 = vdwg.mxu0
    %1659 = vmatpush.bf16.msra.mxu0 %v1018
    %1660 = vmatpush.bf16.msra.mxu0 %v1014
    %1661 = vmatpush.bf16.msra.mxu0 %v1010
    %1662 = vmatpush.bf16.msra.mxu0 %v1006
    %1663 = vmatpush.bf16.msra.mxu0 %v1002
    %1664 = vmatpush.bf16.msra.mxu0 %v998
    %1665 = vmatpush.bf16.msra.mxu0 %v994
    %1666 = vmatpush.bf16.msra.mxu0 %v990
    %1667 = vmatmul.bf16.gmra.mxu0 %v355
    %v1668 = vpop.f32.mrf.mxu0
    %v1669 = vadd.f32 %v1655, %v1668
    %v1670 = vpop.f32.mrf.mxu0
    %v1671 = vadd.f32 %v1657, %v1670
    %1672 = vdwg.mxu0
    %1673 = vmatpush.bf16.msra.mxu0 %v1050
    %1674 = vmatpush.bf16.msra.mxu0 %v1046
    %1675 = vmatpush.bf16.msra.mxu0 %v1042
    %1676 = vmatpush.bf16.msra.mxu0 %v1038
    %1677 = vmatpush.bf16.msra.mxu0 %v1034
    %1678 = vmatpush.bf16.msra.mxu0 %v1030
    %1679 = vmatpush.bf16.msra.mxu0 %v1026
    %1680 = vmatpush.bf16.msra.mxu0 %v1022
    %1681 = vmatmul.bf16.gmra.mxu0 %v356
    %v1682 = vpop.f32.mrf.mxu0
    %v1683 = vadd.f32 %v1669, %v1682
    %v1684 = vpop.f32.mrf.mxu0
    %v1685 = vadd.f32 %v1671, %v1684
    %1686 = vdwg.mxu0
    %1687 = vmatpush.bf16.msra.mxu0 %v1082
    %1688 = vmatpush.bf16.msra.mxu0 %v1078
    %1689 = vmatpush.bf16.msra.mxu0 %v1074
    %1690 = vmatpush.bf16.msra.mxu0 %v1070
    %1691 = vmatpush.bf16.msra.mxu0 %v1066
    %1692 = vmatpush.bf16.msra.mxu0 %v1062
    %1693 = vmatpush.bf16.msra.mxu0 %v1058
    %1694 = vmatpush.bf16.msra.mxu0 %v1054
    %1695 = vmatmul.bf16.gmra.mxu0 %v357
    %v1696 = vpop.f32.mrf.mxu0
    %v1697 = vadd.f32 %v1683, %v1696
    %v1698 = vpop.f32.mrf.mxu0
    %v1699 = vadd.f32 %v1685, %v1698
    %1700 = vdwg.mxu0
    %1701 = vmatpush.bf16.msra.mxu0 %v1114
    %1702 = vmatpush.bf16.msra.mxu0 %v1110
    %1703 = vmatpush.bf16.msra.mxu0 %v1106
    %1704 = vmatpush.bf16.msra.mxu0 %v1102
    %1705 = vmatpush.bf16.msra.mxu0 %v1098
    %1706 = vmatpush.bf16.msra.mxu0 %v1094
    %1707 = vmatpush.bf16.msra.mxu0 %v1090
    %1708 = vmatpush.bf16.msra.mxu0 %v1086
    %1709 = vmatmul.bf16.gmra.mxu0 %v358
    %v1710 = vpop.f32.mrf.mxu0
    %v1711 = vadd.f32 %v1697, %v1710
    %v1712 = vpop.f32.mrf.mxu0
    %v1713 = vadd.f32 %v1699, %v1712
    %1714 = vdwg.mxu0
    %1715 = vmatpush.bf16.msra.mxu0 %v1146
    %1716 = vmatpush.bf16.msra.mxu0 %v1142
    %1717 = vmatpush.bf16.msra.mxu0 %v1138
    %1718 = vmatpush.bf16.msra.mxu0 %v1134
    %1719 = vmatpush.bf16.msra.mxu0 %v1130
    %1720 = vmatpush.bf16.msra.mxu0 %v1126
    %1721 = vmatpush.bf16.msra.mxu0 %v1122
    %1722 = vmatpush.bf16.msra.mxu0 %v1118
    %1723 = vmatmul.bf16.gmra.mxu0 %v359
    %v1724 = vpop.f32.mrf.mxu0
    %v1725 = vadd.f32 %v1711, %v1724
    %v1726 = vpop.f32.mrf.mxu0
    %v1727 = vadd.f32 %v1713, %v1726
    %1728 = vdwg.mxu0
    %1729 = vmatpush.bf16.msra.mxu0 0
    %1730 = vmatpush.bf16.msra.mxu0 0
    %1731 = vmatpush.bf16.msra.mxu0 0
    %1732 = vmatpush.bf16.msra.mxu0 0
    %1733 = vmatpush.bf16.msra.mxu0 0
    %1734 = vmatpush.bf16.msra.mxu0 0
    %1735 = vmatpush.bf16.msra.mxu0 0
    %1736 = vmatpush.bf16.msra.mxu0 %v1150
    %1737 = vmatmul.bf16.gmra.mxu0 %v1349
    %v1738 = vpop.f32.mrf.mxu0
    %v1739 = vadd.f32 %v1725, %v1738
    %v1740 = vpop.f32.mrf.mxu0
    %v1741 = vadd.f32 %v1727, %v1740
    %1742 = vdwg.mxu0
    %v1743 = vmax.f32 %v1445, 0.0
    %v1744 = vmax.f32 %v1543, 0.0
    %v1745 = vmax.f32 %v1641, 0.0
    %v1746 = vmax.f32 %v1739, 0.0
    %v1747 = vmax.f32 %v1447, 0.0
    %v1748 = vmax.f32 %v1545, 0.0
    %v1749 = vmax.f32 %v1643, 0.0
    %v1750 = vmax.f32 %v1741, 0.0
    %v1751 = vpack.c.bf16 %v1747, %v1743
    %v1752 = vpack.c.bf16 %v1748, %v1744
    %v1753 = vpack.c.bf16 %v1749, %v1745
    %v1754 = vpack.c.bf16 %v1750, %v1746
    %v1755 = vld [vmem:[#allocation8] sm:$0xff]
    %v1756 = vld [vmem:[#allocation8 + $0x8] sm:$0xff]
    %v1757 = vld [vmem:[#allocation8 + $0x10] sm:$0xff]
    %v1758 = vld [vmem:[#allocation8 + $0x18] sm:$0xff]
    %v1759 = vld [vmem:[#allocation8 + $0x20] sm:$0xff]
    %v1760 = vld [vmem:[#allocation8 + $0x28] sm:$0xff]
    %v1761 = vld [vmem:[#allocation8 + $0x30] sm:$0xff]
    %v1762 = vld [vmem:[#allocation8 + $0x38] sm:$0xff]
    %v1763 = vld [vmem:[#allocation8 + $0x40] sm:$0xff]
    %v1764 = vld [vmem:[#allocation8 + $0x48] sm:$0xff]
    %v1765 = vld [vmem:[#allocation8 + $0x50] sm:$0xff]
    %v1766 = vld [vmem:[#allocation8 + $0x58] sm:$0xff]
    %v1767 = vld [vmem:[#allocation8 + $0x60] sm:$0xff]
    %v1768 = vld [vmem:[#allocation8 + $0x68] sm:$0xff]
    %v1769 = vld [vmem:[#allocation8 + $0x70] sm:$0xff]
    %v1770 = vld [vmem:[#allocation8 + $0x78] sm:$0xff]
    %v1771 = vld [vmem:[#allocation8 + $0x80] sm:$0xff]
    %v1772 = vld [vmem:[#allocation8 + $0x88] sm:$0xff]
    %v1773 = vld [vmem:[#allocation8 + $0x90] sm:$0xff]
    %v1774 = vld [vmem:[#allocation8 + $0x98] sm:$0xff]
    %v1775 = vld [vmem:[#allocation8 + $0xa0] sm:$0xff]
    %v1776 = vld [vmem:[#allocation8 + $0xa8] sm:$0xff]
    %v1777 = vld [vmem:[#allocation8 + $0xb0] sm:$0xff]
    %v1778 = vld [vmem:[#allocation8 + $0xb8] sm:$0xff]
    %v1779 = vld [vmem:[#allocation8 + $0xc0] sm:$0xff]
    %v1780 = vld [vmem:[#allocation8 + $0xc8] sm:$0xff]
    %v1781 = vld [vmem:[#allocation8 + $0xd0] sm:$0xff]
    %v1782 = vld [vmem:[#allocation8 + $0xd8] sm:$0xff]
    %v1783 = vld [vmem:[#allocation8 + $0xe0] sm:$0xff]
    %v1784 = vld [vmem:[#allocation8 + $0xe8] sm:$0xff]
    %v1785 = vld [vmem:[#allocation8 + $0xf0] sm:$0xff]
    %v1786 = vld [vmem:[#allocation8 + $0xf8] sm:$0xff]
    %v1787 = vld [vmem:[#allocation8 + $0x100] sm:$0xff]
    %v1788 = vld [vmem:[#allocation8 + $0x108] sm:$0xff]
    %v1789 = vld [vmem:[#allocation8 + $0x110] sm:$0xff]
    %v1790 = vld [vmem:[#allocation8 + $0x118] sm:$0xff]
    %v1791 = vld [vmem:[#allocation8 + $0x120] sm:$0xff]
    %v1792 = vld [vmem:[#allocation8 + $0x128] sm:$0xff]
    %v1793 = vld [vmem:[#allocation8 + $0x130] sm:$0xff]
    %v1794 = vld [vmem:[#allocation8 + $0x138] sm:$0xff]
    %v1795 = vld [vmem:[#allocation8 + $0x140] sm:$0xff]
    %v1796 = vld [vmem:[#allocation8 + $0x148] sm:$0xff]
    %v1797 = vld [vmem:[#allocation8 + $0x150] sm:$0xff]
    %v1798 = vld [vmem:[#allocation8 + $0x158] sm:$0xff]
    %v1799 = vld [vmem:[#allocation8 + $0x160] sm:$0xff]
    %v1800 = vld [vmem:[#allocation8 + $0x168] sm:$0xff]
    %v1801 = vld [vmem:[#allocation8 + $0x170] sm:$0xff]
    %v1802 = vld [vmem:[#allocation8 + $0x178] sm:$0xff]
    %v1803 = vld [vmem:[#allocation8 + $0x180] sm:$0xff]
    %v1804 = vld [vmem:[#allocation8 + $0x188] sm:$0xff]
    %v1805 = vld [vmem:[#allocation8 + $0x190] sm:$0xff]
    %v1806 = vld [vmem:[#allocation8 + $0x198] sm:$0xff]
    %v1807 = vld [vmem:[#allocation8 + $0x1a0] sm:$0xff]
    %v1808 = vld [vmem:[#allocation8 + $0x1a8] sm:$0xff]
    %v1809 = vld [vmem:[#allocation8 + $0x1b0] sm:$0xff]
    %v1810 = vld [vmem:[#allocation8 + $0x1b8] sm:$0xff]
    %v1811 = vld [vmem:[#allocation8 + $0x1c0] sm:$0xff]
    %v1812 = vld [vmem:[#allocation8 + $0x1c8] sm:$0xff]
    %v1813 = vld [vmem:[#allocation8 + $0x1d0] sm:$0xff]
    %v1814 = vld [vmem:[#allocation8 + $0x1d8] sm:$0xff]
    %v1815 = vld [vmem:[#allocation8 + $0x1e0] sm:$0xff]
    %v1816 = vld [vmem:[#allocation8 + $0x1e8] sm:$0xff]
    %v1817 = vld [vmem:[#allocation8 + $0x1f0] sm:$0xff]
    %v1818 = vld [vmem:[#allocation8 + $0x1f8] sm:$0xff]
    %v1819 = vld [vmem:[#allocation8 + $0x200] sm:$0xff]
    %v1820 = vld [vmem:[#allocation8 + $0x208] sm:$0xff]
    %v1821 = vld [vmem:[#allocation8 + $0x210] sm:$0xff]
    %v1822 = vld [vmem:[#allocation8 + $0x218] sm:$0xff]
    %v1823 = vld [vmem:[#allocation8 + $0x220] sm:$0xff]
    %v1824 = vld [vmem:[#allocation8 + $0x228] sm:$0xff]
    %v1825 = vld [vmem:[#allocation8 + $0x230] sm:$0xff]
    %v1826 = vld [vmem:[#allocation8 + $0x238] sm:$0xff]
    %v1827 = vld [vmem:[#allocation8 + $0x240] sm:$0xff]
    %v1828 = vld [vmem:[#allocation8 + $0x248] sm:$0xff]
    %v1829 = vld [vmem:[#allocation8 + $0x250] sm:$0xff]
    %v1830 = vld [vmem:[#allocation8 + $0x258] sm:$0xff]
    %v1831 = vld [vmem:[#allocation8 + $0x260] sm:$0xff]
    %v1832 = vld [vmem:[#allocation8 + $0x268] sm:$0xff]
    %v1833 = vld [vmem:[#allocation8 + $0x270] sm:$0xff]
    %v1834 = vld [vmem:[#allocation8 + $0x278] sm:$0xff]
    %v1835 = vld [vmem:[#allocation8 + $0x280] sm:$0xff]
    %v1836 = vld [vmem:[#allocation8 + $0x288] sm:$0xff]
    %v1837 = vld [vmem:[#allocation8 + $0x290] sm:$0xff]
    %v1838 = vld [vmem:[#allocation8 + $0x298] sm:$0xff]
    %v1839 = vld [vmem:[#allocation8 + $0x2a0] sm:$0xff]
    %v1840 = vld [vmem:[#allocation8 + $0x2a8] sm:$0xff]
    %v1841 = vld [vmem:[#allocation8 + $0x2b0] sm:$0xff]
    %v1842 = vld [vmem:[#allocation8 + $0x2b8] sm:$0xff]
    %v1843 = vld [vmem:[#allocation8 + $0x2c0] sm:$0xff]
    %v1844 = vld [vmem:[#allocation8 + $0x2c8] sm:$0xff]
    %v1845 = vld [vmem:[#allocation8 + $0x2d0] sm:$0xff]
    %v1846 = vld [vmem:[#allocation8 + $0x2d8] sm:$0xff]
    %v1847 = vld [vmem:[#allocation8 + $0x2e0] sm:$0xff]
    %v1848 = vld [vmem:[#allocation8 + $0x2e8] sm:$0xff]
    %v1849 = vld [vmem:[#allocation8 + $0x2f0] sm:$0xff]
    %v1850 = vld [vmem:[#allocation8 + $0x2f8] sm:$0xff]
    %v1851 = vld [vmem:[#allocation8 + $0x300] sm:$0xff]
    %v1852 = vld [vmem:[#allocation8 + $0x308] sm:$0xff]
    %v1853 = vld [vmem:[#allocation8 + $0x310] sm:$0xff]
    %v1854 = vld [vmem:[#allocation8 + $0x318] sm:$0xff]
    %v1855 = vld [vmem:[#allocation8 + $0x320] sm:$0xff]
    %v1856 = vld [vmem:[#allocation8 + $0x328] sm:$0xff]
    %v1857 = vld [vmem:[#allocation8 + $0x330] sm:$0xff]
    %v1858 = vld [vmem:[#allocation8 + $0x338] sm:$0xff]
    %v1859 = vld [vmem:[#allocation8 + $0x340] sm:$0xff]
    %v1860 = vld [vmem:[#allocation8 + $0x348] sm:$0xff]
    %v1861 = vld [vmem:[#allocation8 + $0x350] sm:$0xff]
    %v1862 = vld [vmem:[#allocation8 + $0x358] sm:$0xff]
    %v1863 = vld [vmem:[#allocation8 + $0x360] sm:$0xff]
    %v1864 = vld [vmem:[#allocation8 + $0x368] sm:$0xff]
    %v1865 = vld [vmem:[#allocation8 + $0x370] sm:$0xff]
    %v1866 = vld [vmem:[#allocation8 + $0x378] sm:$0xff]
    %v1867 = vld [vmem:[#allocation8 + $0x380] sm:$0xff]
    %v1868 = vld [vmem:[#allocation8 + $0x388] sm:$0xff]
    %v1869 = vld [vmem:[#allocation8 + $0x390] sm:$0xff]
    %v1870 = vld [vmem:[#allocation8 + $0x398] sm:$0xff]
    %v1871 = vld [vmem:[#allocation8 + $0x3a0] sm:$0xff]
    %v1872 = vld [vmem:[#allocation8 + $0x3a8] sm:$0xff]
    %v1873 = vld [vmem:[#allocation8 + $0x3b0] sm:$0xff]
    %v1874 = vld [vmem:[#allocation8 + $0x3b8] sm:$0xff]
    %v1875 = vld [vmem:[#allocation8 + $0x3c0] sm:$0xff]
    %v1876 = vld [vmem:[#allocation8 + $0x3c8] sm:$0xff]
    %v1877 = vld [vmem:[#allocation8 + $0x3d0] sm:$0xff]
    %v1878 = vld [vmem:[#allocation8 + $0x3d8] sm:$0xff]
    %v1879 = vld [vmem:[#allocation8 + $0x3e0] sm:$0xff]
    %v1880 = vld [vmem:[#allocation8 + $0x3e8] sm:$0xff]
    %v1881 = vld [vmem:[#allocation8 + $0x3f0] sm:$0xff]
    %v1882 = vld [vmem:[#allocation8 + $0x3f8] sm:$0xff]
    %v1883 = vld [vmem:[#allocation10] sm:$0xf]
    %v1885 = vperm.slane %v1883, 0
    %v1886 = vperm.slane %v1883, 1
    %v1887 = vperm.slane %v1883, 2
    %v1888 = vperm.slane %v1883, 3
    %v2021 = vunpack.c.l.b16 %v1755
    %v2022 = vunpack.c.h.b16 %v1755
    %v2023 = vunpack.c.l.b16 %v1756
    %v2024 = vunpack.c.h.b16 %v1756
    %v2025 = vunpack.c.l.b16 %v1757
    %v2026 = vunpack.c.h.b16 %v1757
    %v2027 = vunpack.c.l.b16 %v1758
    %v2028 = vunpack.c.h.b16 %v1758
    %v2029 = vunpack.c.l.b16 %v1759
    %v2030 = vunpack.c.h.b16 %v1759
    %v2031 = vunpack.c.l.b16 %v1760
    %v2032 = vunpack.c.h.b16 %v1760
    %v2033 = vunpack.c.l.b16 %v1761
    %v2034 = vunpack.c.h.b16 %v1761
    %v2035 = vunpack.c.l.b16 %v1762
    %v2036 = vunpack.c.h.b16 %v1762
    %v2037 = vunpack.c.l.b16 %v1763
    %v2038 = vunpack.c.h.b16 %v1763
    %v2039 = vunpack.c.l.b16 %v1764
    %v2040 = vunpack.c.h.b16 %v1764
    %v2041 = vunpack.c.l.b16 %v1765
    %v2042 = vunpack.c.h.b16 %v1765
    %v2043 = vunpack.c.l.b16 %v1766
    %v2044 = vunpack.c.h.b16 %v1766
    %v2045 = vunpack.c.l.b16 %v1767
    %v2046 = vunpack.c.h.b16 %v1767
    %v2047 = vunpack.c.l.b16 %v1768
    %v2048 = vunpack.c.h.b16 %v1768
    %v2049 = vunpack.c.l.b16 %v1769
    %v2050 = vunpack.c.h.b16 %v1769
    %v2051 = vunpack.c.l.b16 %v1770
    %v2052 = vunpack.c.h.b16 %v1770
    %v2053 = vunpack.c.l.b16 %v1771
    %v2054 = vunpack.c.h.b16 %v1771
    %v2055 = vunpack.c.l.b16 %v1772
    %v2056 = vunpack.c.h.b16 %v1772
    %v2057 = vunpack.c.l.b16 %v1773
    %v2058 = vunpack.c.h.b16 %v1773
    %v2059 = vunpack.c.l.b16 %v1774
    %v2060 = vunpack.c.h.b16 %v1774
    %v2061 = vunpack.c.l.b16 %v1775
    %v2062 = vunpack.c.h.b16 %v1775
    %v2063 = vunpack.c.l.b16 %v1776
    %v2064 = vunpack.c.h.b16 %v1776
    %v2065 = vunpack.c.l.b16 %v1777
    %v2066 = vunpack.c.h.b16 %v1777
    %v2067 = vunpack.c.l.b16 %v1778
    %v2068 = vunpack.c.h.b16 %v1778
    %v2069 = vunpack.c.l.b16 %v1779
    %v2070 = vunpack.c.h.b16 %v1779
    %v2071 = vunpack.c.l.b16 %v1780
    %v2072 = vunpack.c.h.b16 %v1780
    %v2073 = vunpack.c.l.b16 %v1781
    %v2074 = vunpack.c.h.b16 %v1781
    %v2075 = vunpack.c.l.b16 %v1782
    %v2076 = vunpack.c.h.b16 %v1782
    %v2077 = vunpack.c.l.b16 %v1783
    %v2078 = vunpack.c.h.b16 %v1783
    %v2079 = vunpack.c.l.b16 %v1784
    %v2080 = vunpack.c.h.b16 %v1784
    %v2081 = vunpack.c.l.b16 %v1785
    %v2082 = vunpack.c.h.b16 %v1785
    %v2083 = vunpack.c.l.b16 %v1786
    %v2084 = vunpack.c.h.b16 %v1786
    %v2085 = vunpack.c.l.b16 %v1787
    %v2086 = vunpack.c.h.b16 %v1787
    %v2087 = vunpack.c.l.b16 %v1788
    %v2088 = vunpack.c.h.b16 %v1788
    %v2089 = vunpack.c.l.b16 %v1789
    %v2090 = vunpack.c.h.b16 %v1789
    %v2091 = vunpack.c.l.b16 %v1790
    %v2092 = vunpack.c.h.b16 %v1790
    %v2093 = vunpack.c.l.b16 %v1791
    %v2094 = vunpack.c.h.b16 %v1791
    %v2095 = vunpack.c.l.b16 %v1792
    %v2096 = vunpack.c.h.b16 %v1792
    %v2097 = vunpack.c.l.b16 %v1793
    %v2098 = vunpack.c.h.b16 %v1793
    %v2099 = vunpack.c.l.b16 %v1794
    %v2100 = vunpack.c.h.b16 %v1794
    %v2101 = vunpack.c.l.b16 %v1795
    %v2102 = vunpack.c.h.b16 %v1795
    %v2103 = vunpack.c.l.b16 %v1796
    %v2104 = vunpack.c.h.b16 %v1796
    %v2105 = vunpack.c.l.b16 %v1797
    %v2106 = vunpack.c.h.b16 %v1797
    %v2107 = vunpack.c.l.b16 %v1798
    %v2108 = vunpack.c.h.b16 %v1798
    %v2109 = vunpack.c.l.b16 %v1799
    %v2110 = vunpack.c.h.b16 %v1799
    %v2111 = vunpack.c.l.b16 %v1800
    %v2112 = vunpack.c.h.b16 %v1800
    %v2113 = vunpack.c.l.b16 %v1801
    %v2114 = vunpack.c.h.b16 %v1801
    %v2115 = vunpack.c.l.b16 %v1802
    %v2116 = vunpack.c.h.b16 %v1802
    %v2117 = vunpack.c.l.b16 %v1803
    %v2118 = vunpack.c.h.b16 %v1803
    %v2119 = vunpack.c.l.b16 %v1804
    %v2120 = vunpack.c.h.b16 %v1804
    %v2121 = vunpack.c.l.b16 %v1805
    %v2122 = vunpack.c.h.b16 %v1805
    %v2123 = vunpack.c.l.b16 %v1806
    %v2124 = vunpack.c.h.b16 %v1806
    %v2125 = vunpack.c.l.b16 %v1807
    %v2126 = vunpack.c.h.b16 %v1807
    %v2127 = vunpack.c.l.b16 %v1808
    %v2128 = vunpack.c.h.b16 %v1808
    %v2129 = vunpack.c.l.b16 %v1809
    %v2130 = vunpack.c.h.b16 %v1809
    %v2131 = vunpack.c.l.b16 %v1810
    %v2132 = vunpack.c.h.b16 %v1810
    %v2133 = vunpack.c.l.b16 %v1811
    %v2134 = vunpack.c.h.b16 %v1811
    %v2135 = vunpack.c.l.b16 %v1812
    %v2136 = vunpack.c.h.b16 %v1812
    %v2137 = vunpack.c.l.b16 %v1813
    %v2138 = vunpack.c.h.b16 %v1813
    %v2139 = vunpack.c.l.b16 %v1814
    %v2140 = vunpack.c.h.b16 %v1814
    %v2141 = vunpack.c.l.b16 %v1815
    %v2142 = vunpack.c.h.b16 %v1815
    %v2143 = vunpack.c.l.b16 %v1816
    %v2144 = vunpack.c.h.b16 %v1816
    %v2145 = vunpack.c.l.b16 %v1817
    %v2146 = vunpack.c.h.b16 %v1817
    %v2147 = vunpack.c.l.b16 %v1818
    %v2148 = vunpack.c.h.b16 %v1818
    %v2149 = vunpack.c.l.b16 %v1819
    %v2150 = vunpack.c.h.b16 %v1819
    %v2151 = vunpack.c.l.b16 %v1820
    %v2152 = vunpack.c.h.b16 %v1820
    %v2153 = vunpack.c.l.b16 %v1821
    %v2154 = vunpack.c.h.b16 %v1821
    %v2155 = vunpack.c.l.b16 %v1822
    %v2156 = vunpack.c.h.b16 %v1822
    %v2157 = vunpack.c.l.b16 %v1823
    %v2158 = vunpack.c.h.b16 %v1823
    %v2159 = vunpack.c.l.b16 %v1824
    %v2160 = vunpack.c.h.b16 %v1824
    %v2161 = vunpack.c.l.b16 %v1825
    %v2162 = vunpack.c.h.b16 %v1825
    %v2163 = vunpack.c.l.b16 %v1826
    %v2164 = vunpack.c.h.b16 %v1826
    %v2165 = vunpack.c.l.b16 %v1827
    %v2166 = vunpack.c.h.b16 %v1827
    %v2167 = vunpack.c.l.b16 %v1828
    %v2168 = vunpack.c.h.b16 %v1828
    %v2169 = vunpack.c.l.b16 %v1829
    %v2170 = vunpack.c.h.b16 %v1829
    %v2171 = vunpack.c.l.b16 %v1830
    %v2172 = vunpack.c.h.b16 %v1830
    %v2173 = vunpack.c.l.b16 %v1831
    %v2174 = vunpack.c.h.b16 %v1831
    %v2175 = vunpack.c.l.b16 %v1832
    %v2176 = vunpack.c.h.b16 %v1832
    %v2177 = vunpack.c.l.b16 %v1833
    %v2178 = vunpack.c.h.b16 %v1833
    %v2179 = vunpack.c.l.b16 %v1834
    %v2180 = vunpack.c.h.b16 %v1834
    %v2181 = vunpack.c.l.b16 %v1835
    %v2182 = vunpack.c.h.b16 %v1835
    %v2183 = vunpack.c.l.b16 %v1836
    %v2184 = vunpack.c.h.b16 %v1836
    %v2185 = vunpack.c.l.b16 %v1837
    %v2186 = vunpack.c.h.b16 %v1837
    %v2187 = vunpack.c.l.b16 %v1838
    %v2188 = vunpack.c.h.b16 %v1838
    %v2189 = vunpack.c.l.b16 %v1839
    %v2190 = vunpack.c.h.b16 %v1839
    %v2191 = vunpack.c.l.b16 %v1840
    %v2192 = vunpack.c.h.b16 %v1840
    %v2193 = vunpack.c.l.b16 %v1841
    %v2194 = vunpack.c.h.b16 %v1841
    %v2195 = vunpack.c.l.b16 %v1842
    %v2196 = vunpack.c.h.b16 %v1842
    %v2197 = vunpack.c.l.b16 %v1843
    %v2198 = vunpack.c.h.b16 %v1843
    %v2199 = vunpack.c.l.b16 %v1844
    %v2200 = vunpack.c.h.b16 %v1844
    %v2201 = vunpack.c.l.b16 %v1845
    %v2202 = vunpack.c.h.b16 %v1845
    %v2203 = vunpack.c.l.b16 %v1846
    %v2204 = vunpack.c.h.b16 %v1846
    %v2205 = vunpack.c.l.b16 %v1847
    %v2206 = vunpack.c.h.b16 %v1847
    %v2207 = vunpack.c.l.b16 %v1848
    %v2208 = vunpack.c.h.b16 %v1848
    %v2209 = vunpack.c.l.b16 %v1849
    %v2210 = vunpack.c.h.b16 %v1849
    %v2211 = vunpack.c.l.b16 %v1850
    %v2212 = vunpack.c.h.b16 %v1850
    %v2213 = vunpack.c.l.b16 %v1851
    %v2214 = vunpack.c.h.b16 %v1851
    %v2215 = vunpack.c.l.b16 %v1852
    %v2216 = vunpack.c.h.b16 %v1852
    %v2217 = vunpack.c.l.b16 %v1853
    %v2218 = vunpack.c.h.b16 %v1853
    %v2219 = vunpack.c.l.b16 %v1854
    %v2220 = vunpack.c.h.b16 %v1854
    %v2221 = vunpack.c.l.b16 %v1855
    %v2222 = vunpack.c.h.b16 %v1855
    %v2223 = vunpack.c.l.b16 %v1856
    %v2224 = vunpack.c.h.b16 %v1856
    %v2225 = vunpack.c.l.b16 %v1857
    %v2226 = vunpack.c.h.b16 %v1857
    %v2227 = vunpack.c.l.b16 %v1858
    %v2228 = vunpack.c.h.b16 %v1858
    %v2229 = vunpack.c.l.b16 %v1859
    %v2230 = vunpack.c.h.b16 %v1859
    %v2231 = vunpack.c.l.b16 %v1860
    %v2232 = vunpack.c.h.b16 %v1860
    %v2233 = vunpack.c.l.b16 %v1861
    %v2234 = vunpack.c.h.b16 %v1861
    %v2235 = vunpack.c.l.b16 %v1862
    %v2236 = vunpack.c.h.b16 %v1862
    %v2237 = vunpack.c.l.b16 %v1863
    %v2238 = vunpack.c.h.b16 %v1863
    %v2239 = vunpack.c.l.b16 %v1864
    %v2240 = vunpack.c.h.b16 %v1864
    %v2241 = vunpack.c.l.b16 %v1865
    %v2242 = vunpack.c.h.b16 %v1865
    %v2243 = vunpack.c.l.b16 %v1866
    %v2244 = vunpack.c.h.b16 %v1866
    %v2245 = vunpack.c.l.b16 %v1867
    %v2246 = vunpack.c.h.b16 %v1867
    %v2247 = vunpack.c.l.b16 %v1868
    %v2248 = vunpack.c.h.b16 %v1868
    %v2249 = vunpack.c.l.b16 %v1869
    %v2250 = vunpack.c.h.b16 %v1869
    %v2251 = vunpack.c.l.b16 %v1870
    %v2252 = vunpack.c.h.b16 %v1870
    %v2253 = vunpack.c.l.b16 %v1871
    %v2254 = vunpack.c.h.b16 %v1871
    %v2255 = vunpack.c.l.b16 %v1872
    %v2256 = vunpack.c.h.b16 %v1872
    %v2257 = vunpack.c.l.b16 %v1873
    %v2258 = vunpack.c.h.b16 %v1873
    %v2259 = vunpack.c.l.b16 %v1874
    %v2260 = vunpack.c.h.b16 %v1874
    %v2261 = vunpack.c.l.b16 %v1875
    %v2262 = vunpack.c.h.b16 %v1875
    %v2263 = vunpack.c.l.b16 %v1876
    %v2264 = vunpack.c.h.b16 %v1876
    %v2265 = vunpack.c.l.b16 %v1877
    %v2266 = vunpack.c.h.b16 %v1877
    %v2267 = vunpack.c.l.b16 %v1878
    %v2268 = vunpack.c.h.b16 %v1878
    %v2269 = vunpack.c.l.b16 %v1879
    %v2270 = vunpack.c.h.b16 %v1879
    %v2271 = vunpack.c.l.b16 %v1880
    %v2272 = vunpack.c.h.b16 %v1880
    %v2273 = vunpack.c.l.b16 %v1881
    %v2274 = vunpack.c.h.b16 %v1881
    %v2275 = vunpack.c.l.b16 %v1882
    %v2276 = vunpack.c.h.b16 %v1882
    %v2277 = vpack.c.b16 %v2025, %v2021
    %v2278 = vpack.c.b16 %v2026, %v2022
    %v2279 = vpack.c.b16 %v2027, %v2023
    %v2280 = vpack.c.b16 %v2028, %v2024
    %v2281 = vpack.c.b16 %v2033, %v2029
    %v2282 = vpack.c.b16 %v2034, %v2030
    %v2283 = vpack.c.b16 %v2035, %v2031
    %v2284 = vpack.c.b16 %v2036, %v2032
    %v2285 = vpack.c.b16 %v2041, %v2037
    %v2286 = vpack.c.b16 %v2042, %v2038
    %v2287 = vpack.c.b16 %v2043, %v2039
    %v2288 = vpack.c.b16 %v2044, %v2040
    %v2289 = vpack.c.b16 %v2049, %v2045
    %v2290 = vpack.c.b16 %v2050, %v2046
    %v2291 = vpack.c.b16 %v2051, %v2047
    %v2292 = vpack.c.b16 %v2052, %v2048
    %v2293 = vpack.c.b16 %v2057, %v2053
    %v2294 = vpack.c.b16 %v2058, %v2054
    %v2295 = vpack.c.b16 %v2059, %v2055
    %v2296 = vpack.c.b16 %v2060, %v2056
    %v2297 = vpack.c.b16 %v2065, %v2061
    %v2298 = vpack.c.b16 %v2066, %v2062
    %v2299 = vpack.c.b16 %v2067, %v2063
    %v2300 = vpack.c.b16 %v2068, %v2064
    %v2301 = vpack.c.b16 %v2073, %v2069
    %v2302 = vpack.c.b16 %v2074, %v2070
    %v2303 = vpack.c.b16 %v2075, %v2071
    %v2304 = vpack.c.b16 %v2076, %v2072
    %v2305 = vpack.c.b16 %v2081, %v2077
    %v2306 = vpack.c.b16 %v2082, %v2078
    %v2307 = vpack.c.b16 %v2083, %v2079
    %v2308 = vpack.c.b16 %v2084, %v2080
    %v2309 = vpack.c.b16 %v2089, %v2085
    %v2310 = vpack.c.b16 %v2090, %v2086
    %v2311 = vpack.c.b16 %v2091, %v2087
    %v2312 = vpack.c.b16 %v2092, %v2088
    %v2313 = vpack.c.b16 %v2097, %v2093
    %v2314 = vpack.c.b16 %v2098, %v2094
    %v2315 = vpack.c.b16 %v2099, %v2095
    %v2316 = vpack.c.b16 %v2100, %v2096
    %v2317 = vpack.c.b16 %v2105, %v2101
    %v2318 = vpack.c.b16 %v2106, %v2102
    %v2319 = vpack.c.b16 %v2107, %v2103
    %v2320 = vpack.c.b16 %v2108, %v2104
    %v2321 = vpack.c.b16 %v2113, %v2109
    %v2322 = vpack.c.b16 %v2114, %v2110
    %v2323 = vpack.c.b16 %v2115, %v2111
    %v2324 = vpack.c.b16 %v2116, %v2112
    %v2325 = vpack.c.b16 %v2121, %v2117
    %v2326 = vpack.c.b16 %v2122, %v2118
    %v2327 = vpack.c.b16 %v2123, %v2119
    %v2328 = vpack.c.b16 %v2124, %v2120
    %v2329 = vpack.c.b16 %v2129, %v2125
    %v2330 = vpack.c.b16 %v2130, %v2126
    %v2331 = vpack.c.b16 %v2131, %v2127
    %v2332 = vpack.c.b16 %v2132, %v2128
    %v2333 = vpack.c.b16 %v2137, %v2133
    %v2334 = vpack.c.b16 %v2138, %v2134
    %v2335 = vpack.c.b16 %v2139, %v2135
    %v2336 = vpack.c.b16 %v2140, %v2136
    %v2337 = vpack.c.b16 %v2145, %v2141
    %v2338 = vpack.c.b16 %v2146, %v2142
    %v2339 = vpack.c.b16 %v2147, %v2143
    %v2340 = vpack.c.b16 %v2148, %v2144
    %v2341 = vpack.c.b16 %v2153, %v2149
    %v2342 = vpack.c.b16 %v2154, %v2150
    %v2343 = vpack.c.b16 %v2155, %v2151
    %v2344 = vpack.c.b16 %v2156, %v2152
    %v2345 = vpack.c.b16 %v2161, %v2157
    %v2346 = vpack.c.b16 %v2162, %v2158
    %v2347 = vpack.c.b16 %v2163, %v2159
    %v2348 = vpack.c.b16 %v2164, %v2160
    %v2349 = vpack.c.b16 %v2169, %v2165
    %v2350 = vpack.c.b16 %v2170, %v2166
    %v2351 = vpack.c.b16 %v2171, %v2167
    %v2352 = vpack.c.b16 %v2172, %v2168
    %v2353 = vpack.c.b16 %v2177, %v2173
    %v2354 = vpack.c.b16 %v2178, %v2174
    %v2355 = vpack.c.b16 %v2179, %v2175
    %v2356 = vpack.c.b16 %v2180, %v2176
    %v2357 = vpack.c.b16 %v2185, %v2181
    %v2358 = vpack.c.b16 %v2186, %v2182
    %v2359 = vpack.c.b16 %v2187, %v2183
    %v2360 = vpack.c.b16 %v2188, %v2184
    %v2361 = vpack.c.b16 %v2193, %v2189
    %v2362 = vpack.c.b16 %v2194, %v2190
    %v2363 = vpack.c.b16 %v2195, %v2191
    %v2364 = vpack.c.b16 %v2196, %v2192
    %v2365 = vpack.c.b16 %v2201, %v2197
    %v2366 = vpack.c.b16 %v2202, %v2198
    %v2367 = vpack.c.b16 %v2203, %v2199
    %v2368 = vpack.c.b16 %v2204, %v2200
    %v2369 = vpack.c.b16 %v2209, %v2205
    %v2370 = vpack.c.b16 %v2210, %v2206
    %v2371 = vpack.c.b16 %v2211, %v2207
    %v2372 = vpack.c.b16 %v2212, %v2208
    %v2373 = vpack.c.b16 %v2217, %v2213
    %v2374 = vpack.c.b16 %v2218, %v2214
    %v2375 = vpack.c.b16 %v2219, %v2215
    %v2376 = vpack.c.b16 %v2220, %v2216
    %v2377 = vpack.c.b16 %v2225, %v2221
    %v2378 = vpack.c.b16 %v2226, %v2222
    %v2379 = vpack.c.b16 %v2227, %v2223
    %v2380 = vpack.c.b16 %v2228, %v2224
    %v2381 = vpack.c.b16 %v2233, %v2229
    %v2382 = vpack.c.b16 %v2234, %v2230
    %v2383 = vpack.c.b16 %v2235, %v2231
    %v2384 = vpack.c.b16 %v2236, %v2232
    %v2385 = vpack.c.b16 %v2241, %v2237
    %v2386 = vpack.c.b16 %v2242, %v2238
    %v2387 = vpack.c.b16 %v2243, %v2239
    %v2388 = vpack.c.b16 %v2244, %v2240
    %v2389 = vpack.c.b16 %v2249, %v2245
    %v2390 = vpack.c.b16 %v2250, %v2246
    %v2391 = vpack.c.b16 %v2251, %v2247
    %v2392 = vpack.c.b16 %v2252, %v2248
    %v2393 = vpack.c.b16 %v2257, %v2253
    %v2394 = vpack.c.b16 %v2258, %v2254
    %v2395 = vpack.c.b16 %v2259, %v2255
    %v2396 = vpack.c.b16 %v2260, %v2256
    %v2397 = vpack.c.b16 %v2265, %v2261
    %v2398 = vpack.c.b16 %v2266, %v2262
    %v2399 = vpack.c.b16 %v2267, %v2263
    %v2400 = vpack.c.b16 %v2268, %v2264
    %v2401 = vpack.c.b16 %v2273, %v2269
    %v2402 = vpack.c.b16 %v2274, %v2270
    %v2403 = vpack.c.b16 %v2275, %v2271
    %v2404 = vpack.c.b16 %v2276, %v2272
    %2533 = vmatpush.bf16.msra.mxu0 %v2305
    %2534 = vmatpush.bf16.msra.mxu0 %v2301
    %2535 = vmatpush.bf16.msra.mxu0 %v2297
    %2536 = vmatpush.bf16.msra.mxu0 %v2293
    %2537 = vmatpush.bf16.msra.mxu0 %v2289
    %2538 = vmatpush.bf16.msra.mxu0 %v2285
    %2539 = vmatpush.bf16.msra.mxu0 %v2281
    %2540 = vmatpush.bf16.msra.mxu0 %v2277
    %2541 = vmatmul.bf16.gmra.mxu0 %v1751
    %v2542 = vpop.f32.mrf.mxu0
    %v2543 = vadd.f32 %v1885, %v2542
    %v2544 = vpop.f32.mrf.mxu0
    %v2545 = vadd.f32 %v1885, %v2544
    %2546 = vdwg.mxu0
    %2547 = vmatpush.bf16.msra.mxu0 %v2337
    %2548 = vmatpush.bf16.msra.mxu0 %v2333
    %2549 = vmatpush.bf16.msra.mxu0 %v2329
    %2550 = vmatpush.bf16.msra.mxu0 %v2325
    %2551 = vmatpush.bf16.msra.mxu0 %v2321
    %2552 = vmatpush.bf16.msra.mxu0 %v2317
    %2553 = vmatpush.bf16.msra.mxu0 %v2313
    %2554 = vmatpush.bf16.msra.mxu0 %v2309
    %2555 = vmatmul.bf16.gmra.mxu0 %v1752
    %v2556 = vpop.f32.mrf.mxu0
    %v2557 = vadd.f32 %v2543, %v2556
    %v2558 = vpop.f32.mrf.mxu0
    %v2559 = vadd.f32 %v2545, %v2558
    %2560 = vdwg.mxu0
    %2561 = vmatpush.bf16.msra.mxu0 %v2369
    %2562 = vmatpush.bf16.msra.mxu0 %v2365
    %2563 = vmatpush.bf16.msra.mxu0 %v2361
    %2564 = vmatpush.bf16.msra.mxu0 %v2357
    %2565 = vmatpush.bf16.msra.mxu0 %v2353
    %2566 = vmatpush.bf16.msra.mxu0 %v2349
    %2567 = vmatpush.bf16.msra.mxu0 %v2345
    %2568 = vmatpush.bf16.msra.mxu0 %v2341
    %2569 = vmatmul.bf16.gmra.mxu0 %v1753
    %v2570 = vpop.f32.mrf.mxu0
    %v2571 = vadd.f32 %v2557, %v2570
    %v2572 = vpop.f32.mrf.mxu0
    %v2573 = vadd.f32 %v2559, %v2572
    %2574 = vdwg.mxu0
    %2575 = vmatpush.bf16.msra.mxu0 %v2401
    %2576 = vmatpush.bf16.msra.mxu0 %v2397
    %2577 = vmatpush.bf16.msra.mxu0 %v2393
    %2578 = vmatpush.bf16.msra.mxu0 %v2389
    %2579 = vmatpush.bf16.msra.mxu0 %v2385
    %2580 = vmatpush.bf16.msra.mxu0 %v2381
    %2581 = vmatpush.bf16.msra.mxu0 %v2377
    %2582 = vmatpush.bf16.msra.mxu0 %v2373
    %2583 = vmatmul.bf16.gmra.mxu0 %v1754
    %v2584 = vpop.f32.mrf.mxu0
    %v2585 = vadd.f32 %v2571, %v2584
    %v2586 = vpop.f32.mrf.mxu0
    %v2587 = vadd.f32 %v2573, %v2586
    %2588 = vdwg.mxu0
    %2589 = vmatpush.bf16.msra.mxu0 %v2306
    %2590 = vmatpush.bf16.msra.mxu0 %v2302
    %2591 = vmatpush.bf16.msra.mxu0 %v2298
    %2592 = vmatpush.bf16.msra.mxu0 %v2294
    %2593 = vmatpush.bf16.msra.mxu0 %v2290
    %2594 = vmatpush.bf16.msra.mxu0 %v2286
    %2595 = vmatpush.bf16.msra.mxu0 %v2282
    %2596 = vmatpush.bf16.msra.mxu0 %v2278
    %2597 = vmatmul.bf16.gmra.mxu0 %v1751
    %v2598 = vpop.f32.mrf.mxu0
    %v2599 = vadd.f32 %v1886, %v2598
    %v2600 = vpop.f32.mrf.mxu0
    %v2601 = vadd.f32 %v1886, %v2600
    %2602 = vdwg.mxu0
    %2603 = vmatpush.bf16.msra.mxu0 %v2338
    %2604 = vmatpush.bf16.msra.mxu0 %v2334
    %2605 = vmatpush.bf16.msra.mxu0 %v2330
    %2606 = vmatpush.bf16.msra.mxu0 %v2326
    %2607 = vmatpush.bf16.msra.mxu0 %v2322
    %2608 = vmatpush.bf16.msra.mxu0 %v2318
    %2609 = vmatpush.bf16.msra.mxu0 %v2314
    %2610 = vmatpush.bf16.msra.mxu0 %v2310
    %2611 = vmatmul.bf16.gmra.mxu0 %v1752
    %v2612 = vpop.f32.mrf.mxu0
    %v2613 = vadd.f32 %v2599, %v2612
    %v2614 = vpop.f32.mrf.mxu0
    %v2615 = vadd.f32 %v2601, %v2614
    %2616 = vdwg.mxu0
    %2617 = vmatpush.bf16.msra.mxu0 %v2370
    %2618 = vmatpush.bf16.msra.mxu0 %v2366
    %2619 = vmatpush.bf16.msra.mxu0 %v2362
    %2620 = vmatpush.bf16.msra.mxu0 %v2358
    %2621 = vmatpush.bf16.msra.mxu0 %v2354
    %2622 = vmatpush.bf16.msra.mxu0 %v2350
    %2623 = vmatpush.bf16.msra.mxu0 %v2346
    %2624 = vmatpush.bf16.msra.mxu0 %v2342
    %2625 = vmatmul.bf16.gmra.mxu0 %v1753
    %v2626 = vpop.f32.mrf.mxu0
    %v2627 = vadd.f32 %v2613, %v2626
    %v2628 = vpop.f32.mrf.mxu0
    %v2629 = vadd.f32 %v2615, %v2628
    %2630 = vdwg.mxu0
    %2631 = vmatpush.bf16.msra.mxu0 %v2402
    %2632 = vmatpush.bf16.msra.mxu0 %v2398
    %2633 = vmatpush.bf16.msra.mxu0 %v2394
    %2634 = vmatpush.bf16.msra.mxu0 %v2390
    %2635 = vmatpush.bf16.msra.mxu0 %v2386
    %2636 = vmatpush.bf16.msra.mxu0 %v2382
    %2637 = vmatpush.bf16.msra.mxu0 %v2378
    %2638 = vmatpush.bf16.msra.mxu0 %v2374
    %2639 = vmatmul.bf16.gmra.mxu0 %v1754
    %v2640 = vpop.f32.mrf.mxu0
    %v2641 = vadd.f32 %v2627, %v2640
    %v2642 = vpop.f32.mrf.mxu0
    %v2643 = vadd.f32 %v2629, %v2642
    %2644 = vdwg.mxu0
    %2645 = vmatpush.bf16.msra.mxu0 %v2307
    %2646 = vmatpush.bf16.msra.mxu0 %v2303
    %2647 = vmatpush.bf16.msra.mxu0 %v2299
    %2648 = vmatpush.bf16.msra.mxu0 %v2295
    %2649 = vmatpush.bf16.msra.mxu0 %v2291
    %2650 = vmatpush.bf16.msra.mxu0 %v2287
    %2651 = vmatpush.bf16.msra.mxu0 %v2283
    %2652 = vmatpush.bf16.msra.mxu0 %v2279
    %2653 = vmatmul.bf16.gmra.mxu0 %v1751
    %v2654 = vpop.f32.mrf.mxu0
    %v2655 = vadd.f32 %v1887, %v2654
    %v2656 = vpop.f32.mrf.mxu0
    %v2657 = vadd.f32 %v1887, %v2656
    %2658 = vdwg.mxu0
    %2659 = vmatpush.bf16.msra.mxu0 %v2339
    %2660 = vmatpush.bf16.msra.mxu0 %v2335
    %2661 = vmatpush.bf16.msra.mxu0 %v2331
    %2662 = vmatpush.bf16.msra.mxu0 %v2327
    %2663 = vmatpush.bf16.msra.mxu0 %v2323
    %2664 = vmatpush.bf16.msra.mxu0 %v2319
    %2665 = vmatpush.bf16.msra.mxu0 %v2315
    %2666 = vmatpush.bf16.msra.mxu0 %v2311
    %2667 = vmatmul.bf16.gmra.mxu0 %v1752
    %v2668 = vpop.f32.mrf.mxu0
    %v2669 = vadd.f32 %v2655, %v2668
    %v2670 = vpop.f32.mrf.mxu0
    %v2671 = vadd.f32 %v2657, %v2670
    %2672 = vdwg.mxu0
    %2673 = vmatpush.bf16.msra.mxu0 %v2371
    %2674 = vmatpush.bf16.msra.mxu0 %v2367
    %2675 = vmatpush.bf16.msra.mxu0 %v2363
    %2676 = vmatpush.bf16.msra.mxu0 %v2359
    %2677 = vmatpush.bf16.msra.mxu0 %v2355
    %2678 = vmatpush.bf16.msra.mxu0 %v2351
    %2679 = vmatpush.bf16.msra.mxu0 %v2347
    %2680 = vmatpush.bf16.msra.mxu0 %v2343
    %2681 = vmatmul.bf16.gmra.mxu0 %v1753
    %v2682 = vpop.f32.mrf.mxu0
    %v2683 = vadd.f32 %v2669, %v2682
    %v2684 = vpop.f32.mrf.mxu0
    %v2685 = vadd.f32 %v2671, %v2684
    %2686 = vdwg.mxu0
    %2687 = vmatpush.bf16.msra.mxu0 %v2403
    %2688 = vmatpush.bf16.msra.mxu0 %v2399
    %2689 = vmatpush.bf16.msra.mxu0 %v2395
    %2690 = vmatpush.bf16.msra.mxu0 %v2391
    %2691 = vmatpush.bf16.msra.mxu0 %v2387
    %2692 = vmatpush.bf16.msra.mxu0 %v2383
    %2693 = vmatpush.bf16.msra.mxu0 %v2379
    %2694 = vmatpush.bf16.msra.mxu0 %v2375
    %2695 = vmatmul.bf16.gmra.mxu0 %v1754
    %v2696 = vpop.f32.mrf.mxu0
    %v2697 = vadd.f32 %v2683, %v2696
    %v2698 = vpop.f32.mrf.mxu0
    %v2699 = vadd.f32 %v2685, %v2698
    %2700 = vdwg.mxu0
    %2701 = vmatpush.bf16.msra.mxu0 %v2308
    %2702 = vmatpush.bf16.msra.mxu0 %v2304
    %2703 = vmatpush.bf16.msra.mxu0 %v2300
    %2704 = vmatpush.bf16.msra.mxu0 %v2296
    %2705 = vmatpush.bf16.msra.mxu0 %v2292
    %2706 = vmatpush.bf16.msra.mxu0 %v2288
    %2707 = vmatpush.bf16.msra.mxu0 %v2284
    %2708 = vmatpush.bf16.msra.mxu0 %v2280
    %2709 = vmatmul.bf16.gmra.mxu0 %v1751
    %v2710 = vpop.f32.mrf.mxu0
    %v2711 = vadd.f32 %v1888, %v2710
    %v2712 = vpop.f32.mrf.mxu0
    %v2713 = vadd.f32 %v1888, %v2712
    %2714 = vdwg.mxu0
    %2715 = vmatpush.bf16.msra.mxu0 %v2340
    %2716 = vmatpush.bf16.msra.mxu0 %v2336
    %2717 = vmatpush.bf16.msra.mxu0 %v2332
    %2718 = vmatpush.bf16.msra.mxu0 %v2328
    %2719 = vmatpush.bf16.msra.mxu0 %v2324
    %2720 = vmatpush.bf16.msra.mxu0 %v2320
    %2721 = vmatpush.bf16.msra.mxu0 %v2316
    %2722 = vmatpush.bf16.msra.mxu0 %v2312
    %2723 = vmatmul.bf16.gmra.mxu0 %v1752
    %v2724 = vpop.f32.mrf.mxu0
    %v2725 = vadd.f32 %v2711, %v2724
    %v2726 = vpop.f32.mrf.mxu0
    %v2727 = vadd.f32 %v2713, %v2726
    %2728 = vdwg.mxu0
    %2729 = vmatpush.bf16.msra.mxu0 %v2372
    %2730 = vmatpush.bf16.msra.mxu0 %v2368
    %2731 = vmatpush.bf16.msra.mxu0 %v2364
    %2732 = vmatpush.bf16.msra.mxu0 %v2360
    %2733 = vmatpush.bf16.msra.mxu0 %v2356
    %2734 = vmatpush.bf16.msra.mxu0 %v2352
    %2735 = vmatpush.bf16.msra.mxu0 %v2348
    %2736 = vmatpush.bf16.msra.mxu0 %v2344
    %2737 = vmatmul.bf16.gmra.mxu0 %v1753
    %v2738 = vpop.f32.mrf.mxu0
    %v2739 = vadd.f32 %v2725, %v2738
    %v2740 = vpop.f32.mrf.mxu0
    %v2741 = vadd.f32 %v2727, %v2740
    %2742 = vdwg.mxu0
    %2743 = vmatpush.bf16.msra.mxu0 %v2404
    %2744 = vmatpush.bf16.msra.mxu0 %v2400
    %2745 = vmatpush.bf16.msra.mxu0 %v2396
    %2746 = vmatpush.bf16.msra.mxu0 %v2392
    %2747 = vmatpush.bf16.msra.mxu0 %v2388
    %2748 = vmatpush.bf16.msra.mxu0 %v2384
    %2749 = vmatpush.bf16.msra.mxu0 %v2380
    %2750 = vmatpush.bf16.msra.mxu0 %v2376
    %2751 = vmatmul.bf16.gmra.mxu0 %v1754
    %v2752 = vpop.f32.mrf.mxu0
    %v2753 = vadd.f32 %v2739, %v2752
    %v2754 = vpop.f32.mrf.mxu0
    %v2755 = vadd.f32 %v2741, %v2754
    %2756 = vdwg.mxu0
    %v2757 = vmax.f32 %v2585, 0.0
    %v2758 = vmax.f32 %v2641, 0.0
    %v2759 = vmax.f32 %v2697, 0.0
    %v2760 = vmax.f32 %v2753, 0.0
    %v2761 = vmax.f32 %v2587, 0.0
    %v2762 = vmax.f32 %v2643, 0.0
    %v2763 = vmax.f32 %v2699, 0.0
    %v2764 = vmax.f32 %v2755, 0.0
    %v2765 = vpack.c.bf16 %v2761, %v2757
    %v2766 = vpack.c.bf16 %v2762, %v2758
    %v2767 = vpack.c.bf16 %v2763, %v2759
    %v2768 = vpack.c.bf16 %v2764, %v2760
    %v2769 = vld [vmem:[#allocation11] sm:$0xf]
    %v2770 = vld [vmem:[#allocation11 + $0x4] sm:$0xf]
    %v2771 = vld [vmem:[#allocation11 + $0x8] sm:$0xf]
    %v2772 = vld [vmem:[#allocation11 + $0xc] sm:$0xf]
    %v2773 = vld [vmem:[#allocation11 + $0x10] sm:$0xf]
    %v2774 = vld [vmem:[#allocation11 + $0x14] sm:$0xf]
    %v2775 = vld [vmem:[#allocation11 + $0x18] sm:$0xf]
    %v2776 = vld [vmem:[#allocation11 + $0x1c] sm:$0xf]
    %v2777 = vld [vmem:[#allocation11 + $0x20] sm:$0xf]
    %v2778 = vld [vmem:[#allocation11 + $0x24] sm:$0xf]
    %v2779 = vld [vmem:[#allocation11 + $0x28] sm:$0xf]
    %v2780 = vld [vmem:[#allocation11 + $0x2c] sm:$0xf]
    %v2781 = vld [vmem:[#allocation11 + $0x30] sm:$0xf]
    %v2782 = vld [vmem:[#allocation11 + $0x34] sm:$0xf]
    %v2783 = vld [vmem:[#allocation11 + $0x38] sm:$0xf]
    %v2784 = vld [vmem:[#allocation11 + $0x3c] sm:$0xf]
    %v2785 = vld [vmem:[#allocation11 + $0x40] sm:$0xf]
    %v2786 = vld [vmem:[#allocation11 + $0x44] sm:$0xf]
    %v2787 = vld [vmem:[#allocation11 + $0x48] sm:$0xf]
    %v2788 = vld [vmem:[#allocation11 + $0x4c] sm:$0xf]
    %v2789 = vld [vmem:[#allocation11 + $0x50] sm:$0xf]
    %v2790 = vld [vmem:[#allocation11 + $0x54] sm:$0xf]
    %v2791 = vld [vmem:[#allocation11 + $0x58] sm:$0xf]
    %v2792 = vld [vmem:[#allocation11 + $0x5c] sm:$0xf]
    %v2793 = vld [vmem:[#allocation11 + $0x60] sm:$0xf]
    %v2794 = vld [vmem:[#allocation11 + $0x64] sm:$0xf]
    %v2795 = vld [vmem:[#allocation11 + $0x68] sm:$0xf]
    %v2796 = vld [vmem:[#allocation11 + $0x6c] sm:$0xf]
    %v2797 = vld [vmem:[#allocation11 + $0x70] sm:$0xf]
    %v2798 = vld [vmem:[#allocation11 + $0x74] sm:$0xf]
    %v2799 = vld [vmem:[#allocation11 + $0x78] sm:$0xf]
    %v2800 = vld [vmem:[#allocation11 + $0x7c] sm:$0xf]
    %v2801 = vld [vmem:[#allocation11 + $0x80] sm:$0xf]
    %v2802 = vld [vmem:[#allocation11 + $0x84] sm:$0xf]
    %v2803 = vld [vmem:[#allocation11 + $0x88] sm:$0xf]
    %v2804 = vld [vmem:[#allocation11 + $0x8c] sm:$0xf]
    %v2805 = vld [vmem:[#allocation11 + $0x90] sm:$0xf]
    %v2806 = vld [vmem:[#allocation11 + $0x94] sm:$0xf]
    %v2807 = vld [vmem:[#allocation11 + $0x98] sm:$0xf]
    %v2808 = vld [vmem:[#allocation11 + $0x9c] sm:$0xf]
    %v2809 = vld [vmem:[#allocation11 + $0xa0] sm:$0xf]
    %v2810 = vld [vmem:[#allocation11 + $0xa4] sm:$0xf]
    %v2811 = vld [vmem:[#allocation11 + $0xa8] sm:$0xf]
    %v2812 = vld [vmem:[#allocation11 + $0xac] sm:$0xf]
    %v2813 = vld [vmem:[#allocation11 + $0xb0] sm:$0xf]
    %v2814 = vld [vmem:[#allocation11 + $0xb4] sm:$0xf]
    %v2815 = vld [vmem:[#allocation11 + $0xb8] sm:$0xf]
    %v2816 = vld [vmem:[#allocation11 + $0xbc] sm:$0xf]
    %v2817 = vld [vmem:[#allocation11 + $0xc0] sm:$0xf]
    %v2818 = vld [vmem:[#allocation11 + $0xc4] sm:$0xf]
    %v2819 = vld [vmem:[#allocation11 + $0xc8] sm:$0xf]
    %v2820 = vld [vmem:[#allocation11 + $0xcc] sm:$0xf]
    %v2821 = vld [vmem:[#allocation11 + $0xd0] sm:$0xf]
    %v2822 = vld [vmem:[#allocation11 + $0xd4] sm:$0xf]
    %v2823 = vld [vmem:[#allocation11 + $0xd8] sm:$0xf]
    %v2824 = vld [vmem:[#allocation11 + $0xdc] sm:$0xf]
    %v2825 = vld [vmem:[#allocation11 + $0xe0] sm:$0xf]
    %v2826 = vld [vmem:[#allocation11 + $0xe4] sm:$0xf]
    %v2827 = vld [vmem:[#allocation11 + $0xe8] sm:$0xf]
    %v2828 = vld [vmem:[#allocation11 + $0xec] sm:$0xf]
    %v2829 = vld [vmem:[#allocation11 + $0xf0] sm:$0xf]
    %v2830 = vld [vmem:[#allocation11 + $0xf4] sm:$0xf]
    %v2831 = vld [vmem:[#allocation11 + $0xf8] sm:$0xf]
    %v2832 = vld [vmem:[#allocation11 + $0xfc] sm:$0xf]
    %v2833 = vld [vmem:[%s6] sm:$0x1]
    %v2835 = vperm.slane %v2833, 0
    %v2901 = vunpack.c.l.b16 %v2769
    %v2902 = vunpack.c.l.b16 %v2770
    %v2903 = vunpack.c.l.b16 %v2771
    %v2904 = vunpack.c.l.b16 %v2772
    %v2905 = vunpack.c.l.b16 %v2773
    %v2906 = vunpack.c.l.b16 %v2774
    %v2907 = vunpack.c.l.b16 %v2775
    %v2908 = vunpack.c.l.b16 %v2776
    %v2909 = vunpack.c.l.b16 %v2777
    %v2910 = vunpack.c.l.b16 %v2778
    %v2911 = vunpack.c.l.b16 %v2779
    %v2912 = vunpack.c.l.b16 %v2780
    %v2913 = vunpack.c.l.b16 %v2781
    %v2914 = vunpack.c.l.b16 %v2782
    %v2915 = vunpack.c.l.b16 %v2783
    %v2916 = vunpack.c.l.b16 %v2784
    %v2917 = vunpack.c.l.b16 %v2785
    %v2918 = vunpack.c.l.b16 %v2786
    %v2919 = vunpack.c.l.b16 %v2787
    %v2920 = vunpack.c.l.b16 %v2788
    %v2921 = vunpack.c.l.b16 %v2789
    %v2922 = vunpack.c.l.b16 %v2790
    %v2923 = vunpack.c.l.b16 %v2791
    %v2924 = vunpack.c.l.b16 %v2792
    %v2925 = vunpack.c.l.b16 %v2793
    %v2926 = vunpack.c.l.b16 %v2794
    %v2927 = vunpack.c.l.b16 %v2795
    %v2928 = vunpack.c.l.b16 %v2796
    %v2929 = vunpack.c.l.b16 %v2797
    %v2930 = vunpack.c.l.b16 %v2798
    %v2931 = vunpack.c.l.b16 %v2799
    %v2932 = vunpack.c.l.b16 %v2800
    %v2933 = vunpack.c.l.b16 %v2801
    %v2934 = vunpack.c.l.b16 %v2802
    %v2935 = vunpack.c.l.b16 %v2803
    %v2936 = vunpack.c.l.b16 %v2804
    %v2937 = vunpack.c.l.b16 %v2805
    %v2938 = vunpack.c.l.b16 %v2806
    %v2939 = vunpack.c.l.b16 %v2807
    %v2940 = vunpack.c.l.b16 %v2808
    %v2941 = vunpack.c.l.b16 %v2809
    %v2942 = vunpack.c.l.b16 %v2810
    %v2943 = vunpack.c.l.b16 %v2811
    %v2944 = vunpack.c.l.b16 %v2812
    %v2945 = vunpack.c.l.b16 %v2813
    %v2946 = vunpack.c.l.b16 %v2814
    %v2947 = vunpack.c.l.b16 %v2815
    %v2948 = vunpack.c.l.b16 %v2816
    %v2949 = vunpack.c.l.b16 %v2817
    %v2950 = vunpack.c.l.b16 %v2818
    %v2951 = vunpack.c.l.b16 %v2819
    %v2952 = vunpack.c.l.b16 %v2820
    %v2953 = vunpack.c.l.b16 %v2821
    %v2954 = vunpack.c.l.b16 %v2822
    %v2955 = vunpack.c.l.b16 %v2823
    %v2956 = vunpack.c.l.b16 %v2824
    %v2957 = vunpack.c.l.b16 %v2825
    %v2958 = vunpack.c.l.b16 %v2826
    %v2959 = vunpack.c.l.b16 %v2827
    %v2960 = vunpack.c.l.b16 %v2828
    %v2961 = vunpack.c.l.b16 %v2829
    %v2962 = vunpack.c.l.b16 %v2830
    %v2963 = vunpack.c.l.b16 %v2831
    %v2964 = vunpack.c.l.b16 %v2832
    %v2965 = vpack.c.b16 %v2902, %v2901
    %v2966 = vpack.c.b16 %v2904, %v2903
    %v2967 = vpack.c.b16 %v2906, %v2905
    %v2968 = vpack.c.b16 %v2908, %v2907
    %v2969 = vpack.c.b16 %v2910, %v2909
    %v2970 = vpack.c.b16 %v2912, %v2911
    %v2971 = vpack.c.b16 %v2914, %v2913
    %v2972 = vpack.c.b16 %v2916, %v2915
    %v2973 = vpack.c.b16 %v2918, %v2917
    %v2974 = vpack.c.b16 %v2920, %v2919
    %v2975 = vpack.c.b16 %v2922, %v2921
    %v2976 = vpack.c.b16 %v2924, %v2923
    %v2977 = vpack.c.b16 %v2926, %v2925
    %v2978 = vpack.c.b16 %v2928, %v2927
    %v2979 = vpack.c.b16 %v2930, %v2929
    %v2980 = vpack.c.b16 %v2932, %v2931
    %v2981 = vpack.c.b16 %v2934, %v2933
    %v2982 = vpack.c.b16 %v2936, %v2935
    %v2983 = vpack.c.b16 %v2938, %v2937
    %v2984 = vpack.c.b16 %v2940, %v2939
    %v2985 = vpack.c.b16 %v2942, %v2941
    %v2986 = vpack.c.b16 %v2944, %v2943
    %v2987 = vpack.c.b16 %v2946, %v2945
    %v2988 = vpack.c.b16 %v2948, %v2947
    %v2989 = vpack.c.b16 %v2950, %v2949
    %v2990 = vpack.c.b16 %v2952, %v2951
    %v2991 = vpack.c.b16 %v2954, %v2953
    %v2992 = vpack.c.b16 %v2956, %v2955
    %v2993 = vpack.c.b16 %v2958, %v2957
    %v2994 = vpack.c.b16 %v2960, %v2959
    %v2995 = vpack.c.b16 %v2962, %v2961
    %v2996 = vpack.c.b16 %v2964, %v2963
    %3029 = vmatpush.bf16.msra.mxu0 %v2972
    %3030 = vmatpush.bf16.msra.mxu0 %v2971
    %3031 = vmatpush.bf16.msra.mxu0 %v2970
    %3032 = vmatpush.bf16.msra.mxu0 %v2969
    %3033 = vmatpush.bf16.msra.mxu0 %v2968
    %3034 = vmatpush.bf16.msra.mxu0 %v2967
    %3035 = vmatpush.bf16.msra.mxu0 %v2966
    %3036 = vmatpush.bf16.msra.mxu0 %v2965
    %3037 = vmatmul.bf16.gmra.mxu0 %v2765
    %v3038 = vpop.f32.mrf.mxu0
    %v3039 = vadd.f32 %v2835, %v3038
    %v3040 = vpop.f32.mrf.mxu0
    %v3041 = vadd.f32 %v2835, %v3040
    %3042 = vdwg.mxu0
    %3043 = vmatpush.bf16.msra.mxu0 %v2980
    %3044 = vmatpush.bf16.msra.mxu0 %v2979
    %3045 = vmatpush.bf16.msra.mxu0 %v2978
    %3046 = vmatpush.bf16.msra.mxu0 %v2977
    %3047 = vmatpush.bf16.msra.mxu0 %v2976
    %3048 = vmatpush.bf16.msra.mxu0 %v2975
    %3049 = vmatpush.bf16.msra.mxu0 %v2974
    %3050 = vmatpush.bf16.msra.mxu0 %v2973
    %3051 = vmatmul.bf16.gmra.mxu0 %v2766
    %v3052 = vpop.f32.mrf.mxu0
    %v3053 = vadd.f32 %v3039, %v3052
    %v3054 = vpop.f32.mrf.mxu0
    %v3055 = vadd.f32 %v3041, %v3054
    %3056 = vdwg.mxu0
    %3057 = vmatpush.bf16.msra.mxu0 %v2988
    %3058 = vmatpush.bf16.msra.mxu0 %v2987
    %3059 = vmatpush.bf16.msra.mxu0 %v2986
    %3060 = vmatpush.bf16.msra.mxu0 %v2985
    %3061 = vmatpush.bf16.msra.mxu0 %v2984
    %3062 = vmatpush.bf16.msra.mxu0 %v2983
    %3063 = vmatpush.bf16.msra.mxu0 %v2982
    %3064 = vmatpush.bf16.msra.mxu0 %v2981
    %3065 = vmatmul.bf16.gmra.mxu0 %v2767
    %v3066 = vpop.f32.mrf.mxu0
    %v3067 = vadd.f32 %v3053, %v3066
    %v3068 = vpop.f32.mrf.mxu0
    %v3069 = vadd.f32 %v3055, %v3068
    %3070 = vdwg.mxu0
    %3071 = vmatpush.bf16.msra.mxu0 %v2996
    %3072 = vmatpush.bf16.msra.mxu0 %v2995
    %3073 = vmatpush.bf16.msra.mxu0 %v2994
    %3074 = vmatpush.bf16.msra.mxu0 %v2993
    %3075 = vmatpush.bf16.msra.mxu0 %v2992
    %3076 = vmatpush.bf16.msra.mxu0 %v2991
    %3077 = vmatpush.bf16.msra.mxu0 %v2990
    %3078 = vmatpush.bf16.msra.mxu0 %v2989
    %3079 = vmatmul.bf16.gmra.mxu0 %v2768
    %v3080 = vpop.f32.mrf.mxu0
    %v3081 = vadd.f32 %v3067, %v3080
    %v3082 = vpop.f32.mrf.mxu0
    %v3083 = vadd.f32 %v3069, %v3082
    %3084 = vdwg.mxu0
    %3085 = vmax.xlane.f32.xlu0 %v3081
    %v3086 = vpop.xlane.xlu0 %3085
    %3087 = vmax.xlane.f32.xlu0 %v3083
    %v3088 = vpop.xlane.xlu0 %3087
    %v3089 = vsub.f32 %v3081, %v3086
    %v3090 = vsub.f32 %v3083, %v3088
    %v3091 = vmul.f32 %v3089, 1.442695
    %v3092 = vpow.pop %v3091
    %v3093 = vmul.f32 %v3090, 1.442695
    %v3094 = vpow.pop %v3093
    %3095 = vadd.xlane.f32.xlu0 %v3092
    %v3096 = vpop.xlane.xlu0 %3095
    %3097 = vadd.xlane.f32.xlu0 %v3094
    %v3098 = vpop.xlane.xlu0 %3097
    %v3099 = vlog2.pop %v3096
    %v3100 = vmul.f32 %v3099, 0.6931472
    %v3101 = vlog2.pop %v3098
    %v3102 = vmul.f32 %v3101, 0.6931472
    %v3103 = vsub.f32 %v3089, %v3100
    %v3104 = vsub.f32 %v3090, %v3102
    %3105 = vst [vmem:[#allocation13] sm:$0xff] %v3103
    %3106 = vst [vmem:[#allocation13 + $0x8] sm:$0xff] %v3104
    // Predicated region
    $region54: #{tpu_custom_call.1} parent=1 // pred_check
      _
    $region55: #{tpu_custom_call.1} parent=1 // pred_check_branch
      %3108 = sbr.rel (0) target = $region57
    $region56: #{tpu_custom_call.1} parent=1 // pred_region
      %3110 = vsyncadd [#allocation4], 0
      %s3111 = sshll.u32 [#allocation13], 4
      %s3112 = int_to_ptr.vmem [resolvable:$true] %s3111
      %s3113 = sshll.u32 %s7, 4
      %s3114 = int_to_ptr.hbm [resolvable:$true] %s3113
      %3119 = dma.vmem_to_hbm [thread:$0]  %s3112, 256, %s3114, [#allocation4], 128, 128, 8
    $region57: #{tpu_custom_call.1} parent=1 // pred_fallthru
      _
    // Predicated region
    $region58: #{tpu_custom_call.1} parent=1 // pred_check
      _
    $region59: #{tpu_custom_call.1} parent=1 // pred_check_branch
      %3121 = sbr.rel (0) target = $region61
    $region60: #{tpu_custom_call.1} parent=1 // pred_region
      %3123 = dma.done [#allocation4], 256
    $region61: #{tpu_custom_call.1} parent=1 // pred_fallthru
      _
    %3124 = vsyncpa [#allocation3], 1
    %3125 = vsyncpa [#allocation6], 1
    %3126 = vsyncpa [#allocation9], 1
    %3127 = vsyncpa [#allocation12], 1
    %3128 = vsyncpa [#allocation4], 1

</llo_original>
